<compile_context>
chip_gen: v6e
topology: v6e:2x2x1
jax: 0.10.0
libtpu: 0.0.40
codegen_flags: <defaults>
</compile_context>

<pallas_src>
import math

import jax
import jax.numpy as jnp
from jax import lax
from jax.experimental import pallas as pl
from jax.experimental.pallas import tpu as pltpu

EMBED_DIM = 10
NUM_HEADS = 2
HEAD_DIM = EMBED_DIM // NUM_HEADS
LN_EPS = 1e-6
SLAB = 128  # lane-aligned per-(component, head) slab width


def _make_kernel(B, L):
    E, H = EMBED_DIM, NUM_HEADS

    def kernel(x_ref, wqkv_ref, bqkv_ref, wo_ref, bo_ref, gamma_ref, beta_ref,
               out_ref, scores_ref):
        x = x_ref[...]                                              # (B*L, E)

        # Fused, lane-aligned QKV projection.  N = 3*H*128; K = E = 10.
        # The 1/sqrt(D) attention scale is folded into the Q slabs of wqkv/bqkv.
        qkv = jnp.dot(x, wqkv_ref[...],
                      preferred_element_type=jnp.float32) + bqkv_ref[...]

        # Per (batch, head) attention.  B*H = 4 -> static unroll.
        for b in range(B):
            r0 = b * L
            o_b = jnp.zeros((L, E), jnp.float32)                    # per-batch accumulator
            for h in range(H):
                q0 = (0 * H + h) * SLAB
                k0 = (1 * H + h) * SLAB
                v0 = (2 * H + h) * SLAB
                qs = qkv[r0:r0 + L, q0:q0 + SLAB]                   # (L, 128), pre-scaled
                ks = qkv[r0:r0 + L, k0:k0 + SLAB]                   # (L, 128)
                vs = qkv[r0:r0 + L, v0:v0 + SLAB]                   # (L, 128)

                # q @ k^T without an explicit transpose: contract last dims.
                # Zero-padded lanes >= D contribute nothing.
                s = lax.dot_general(qs, ks, (((1,), (1,)), ((), ())),
                                    preferred_element_type=jnp.float32)  # (L, L)
                m = jnp.max(s, axis=-1, keepdims=True)
                e = jnp.exp(s - m)
                denom = jnp.sum(e, axis=-1, keepdims=True)
                p = e / denom                                       # exact: rows sum to 1

                scores_ref[b, h] = p
                # Folded output projection for this head: p @ (v_h @ Wo_h).
                vw = jnp.dot(vs, wo_ref[h],
                             preferred_element_type=jnp.float32)    # (L, E)
                o_b = o_b + jnp.dot(p, vw,
                                    preferred_element_type=jnp.float32)

            # Residual + out-proj bias + LayerNorm(eps=1e-6), all f32 on the VPU.
            y = x[r0:r0 + L, :] + o_b + bo_ref[...]
            mean = jnp.mean(y, axis=-1, keepdims=True)
            var = jnp.mean((y - mean) ** 2, axis=-1, keepdims=True)
            y_norm = (y - mean) * lax.rsqrt(var + LN_EPS)
            out_ref[r0:r0 + L, :] = y_norm * gamma_ref[...] + beta_ref[...]

    return kernel


def pack_params(params):
    """Re-pack weights for lane-aligned per-head slabs.

    wqkv: (E, 3*H*128), each (component, head) chunk starts at a 128-lane
    boundary with D real columns (1/sqrt(D) folded into the Q slabs).
    wo_heads: (H, 128, E), rows >= D zero-padded.
    """
    E, H, D = EMBED_DIM, NUM_HEADS, HEAD_DIM
    scale = 1.0 / math.sqrt(D)

    wqkv = jnp.zeros((E, 3 * H * SLAB), jnp.float32)
    bqkv = jnp.zeros((1, 3 * H * SLAB), jnp.float32)
    comps = [(params["wq_t"] * scale, params["bq"] * scale),
             (params["wk_t"], params["bk"]),
             (params["wv_t"], params["bv"])]
    for ci, (w, b) in enumerate(comps):
        for h in range(H):
            col0 = (ci * H + h) * SLAB
            wqkv = wqkv.at[:, col0:col0 + D].set(w[:, h * D:(h + 1) * D])
            bqkv = bqkv.at[:, col0:col0 + D].set(b[:, h * D:(h + 1) * D])

    wo_heads = jnp.zeros((H, SLAB, E), jnp.float32)
    for h in range(H):
        wo_heads = wo_heads.at[h, :D, :].set(params["wo_t"][h * D:(h + 1) * D, :])

    return {
        "wqkv": wqkv, "bqkv": bqkv, "wo_heads": wo_heads, "bo": params["bo"],
        "gamma": params["gamma"], "beta": params["beta"],
    }


def transformer_block(x, packed):
    """x: (B, L, E) float32.  Returns (output (B,L,E), attn_scores (B,H,L,L))."""
    B, L, E = x.shape
    assert E == EMBED_DIM
    BL = B * L
    x_flat = x.reshape(BL, E)            # free reshape outside the kernel

    def full(shape):
        return pl.BlockSpec(shape, lambda i, _s=len(shape): (0,) * _s)

    grid_spec = pltpu.PrefetchScalarGridSpec(
        num_scalar_prefetch=0,
        grid=(1,),                       # single grid step: pipeline overhead paid once
        in_specs=[
            full((BL, E)),                            # x (flattened)
            full((E, 3 * NUM_HEADS * SLAB)),          # fused, lane-aligned Wqkv
            full((1, 3 * NUM_HEADS * SLAB)),          # bqkv
            full((NUM_HEADS, SLAB, E)),               # Wo, pre-split per head
            full((1, E)),                             # bo
            full((1, E)), full((1, E)),               # gamma, beta
        ],
        out_specs=[
            full((BL, E)),
            full((B, NUM_HEADS, L, L)),
        ],
    )

    out_flat, scores = pl.pallas_call(
        _make_kernel(B, L),
        out_shape=(
            jax.ShapeDtypeStruct((BL, E), jnp.float32),
            jax.ShapeDtypeStruct((B, NUM_HEADS, L, L), jnp.float32),
        ),
        grid_spec=grid_spec,
        compiler_params=pltpu.CompilerParams(
            dimension_semantics=("arbitrary",)),
    )(x_flat, packed["wqkv"], packed["bqkv"], packed["wo_heads"], packed["bo"],
      packed["gamma"], packed["beta"])

    return out_flat.reshape(B, L, E), scores


def init_params(key):
    """Deterministic synthetic parameters matching nn.MultiheadAttention + LayerNorm."""
    E = EMBED_DIM
    ks = jax.random.split(key, 6)
    # in_proj_weight (3E, E) split into q/k/v; out_proj.weight (E, E). Stored transposed.
    in_proj_w = jax.random.normal(ks[0], (3 * E, E), jnp.float32) * (1.0 / E ** 0.5)
    in_proj_b = jax.random.normal(ks[1], (3 * E,), jnp.float32) * 0.02
    out_w = jax.random.normal(ks[2], (E, E), jnp.float32) * (1.0 / E ** 0.5)
    out_b = jax.random.normal(ks[3], (E,), jnp.float32) * 0.02
    gamma = jnp.ones((1, E), jnp.float32)
    beta = jnp.zeros((1, E), jnp.float32)
    return {
        "wq_t": in_proj_w[0 * E:1 * E].T,
        "wk_t": in_proj_w[1 * E:2 * E].T,
        "wv_t": in_proj_w[2 * E:3 * E].T,
        "bq": in_proj_b[0 * E:1 * E].reshape(1, E),
        "bk": in_proj_b[1 * E:2 * E].reshape(1, E),
        "bv": in_proj_b[2 * E:3 * E].reshape(1, E),
        "wo_t": out_w.T, "bo": out_b.reshape(1, E),
        "gamma": gamma, "beta": beta,
    }


def reference_forward(x, p):
    """Pure-JAX reference replicating PyTorch MultiheadAttention + LayerNorm semantics."""
    B, L, E = x.shape
    q = x @ p["wq_t"] + p["bq"]
    k = x @ p["wk_t"] + p["bk"]
    v = x @ p["wv_t"] + p["bv"]
    qh = q.reshape(B, L, NUM_HEADS, HEAD_DIM).transpose(0, 2, 1, 3)
    kh = k.reshape(B, L, NUM_HEADS, HEAD_DIM).transpose(0, 2, 1, 3)
    vh = v.reshape(B, L, NUM_HEADS, HEAD_DIM).transpose(0, 2, 1, 3)
    s = jnp.einsum("bhqd,bhkd->bhqk", qh, kh) / (HEAD_DIM ** 0.5)
    a = jax.nn.softmax(s, axis=-1)
    o = jnp.einsum("bhqk,bhkd->bhqd", a, vh).transpose(0, 2, 1, 3).reshape(B, L, E)
    attn_out = o @ p["wo_t"] + p["bo"]
    y = x + attn_out
    mean = jnp.mean(y, axis=-1, keepdims=True)
    var = jnp.mean((y - mean) ** 2, axis=-1, keepdims=True)
    out = (y - mean) / jnp.sqrt(var + LN_EPS) * p["gamma"] + p["beta"]
    return out, a


if __name__ == "__main__":
    key = jax.random.PRNGKey(0)
    k_x, k_p = jax.random.split(key)

    B, L = 2, 8
    x = jax.random.normal(k_x, (B, L, EMBED_DIM), jnp.float32)
    params = init_params(k_p)
    packed = pack_params(params)

    out, scores = transformer_block(x, packed)
    out = jax.block_until_ready(out)
    scores = jax.block_until_ready(scores)

    ref_out, ref_scores = reference_forward(x, params)
    # 1e-3 tolerance covers MXU f32 matmul pass differences vs XLA default
    # precision; softmax normalization itself is now exact.
    assert jnp.allclose(out, ref_out, atol=1e-3, rtol=1e-3)
    assert jnp.allclose(scores, ref_scores, atol=1e-3, rtol=1e-3)

    print("KERNEL_OK")
</pallas_src>

<mosaic_0001>
module attributes {stable_mosaic.version = 11 : i64} {
  func.func @kernel(%arg0: i32, %arg1: memref<16x10xf32, #tpu.memory_space<vmem>>, %arg2: memref<10x768xf32, #tpu.memory_space<vmem>>, %arg3: memref<1x768xf32, #tpu.memory_space<vmem>>, %arg4: memref<2x128x10xf32, #tpu.memory_space<vmem>>, %arg5: memref<1x10xf32, #tpu.memory_space<vmem>>, %arg6: memref<1x10xf32, #tpu.memory_space<vmem>>, %arg7: memref<1x10xf32, #tpu.memory_space<vmem>>, %arg8: memref<16x10xf32, #tpu.memory_space<vmem>>, %arg9: memref<2x2x8x8xf32, #tpu.memory_space<vmem>>) attributes {dimension_semantics = [#tpu.dimension_semantics<arbitrary>], iteration_bounds = array<i64: 1>, scalar_prefetch = 0 : i64, scratch_operands = 0 : i64, tpu.core_type = #tpu.core_type<tc>, window_params = [{pipeline_mode = #tpu.pipeline_mode<synchronous>, transform_indices = @transform_0, window_bounds = array<i64: 16, 10>}, {pipeline_mode = #tpu.pipeline_mode<synchronous>, transform_indices = @transform_1, window_bounds = array<i64: 10, 768>}, {pipeline_mode = #tpu.pipeline_mode<synchronous>, transform_indices = @transform_2, window_bounds = array<i64: 1, 768>}, {pipeline_mode = #tpu.pipeline_mode<synchronous>, transform_indices = @transform_3, window_bounds = array<i64: 2, 128, 10>}, {pipeline_mode = #tpu.pipeline_mode<synchronous>, transform_indices = @transform_4, window_bounds = array<i64: 1, 10>}, {pipeline_mode = #tpu.pipeline_mode<synchronous>, transform_indices = @transform_5, window_bounds = array<i64: 1, 10>}, {pipeline_mode = #tpu.pipeline_mode<synchronous>, transform_indices = @transform_6, window_bounds = array<i64: 1, 10>}, {pipeline_mode = #tpu.pipeline_mode<synchronous>, transform_indices = @transform_7, window_bounds = array<i64: 16, 10>}, {pipeline_mode = #tpu.pipeline_mode<synchronous>, transform_indices = @transform_8, window_bounds = array<i64: 2, 2, 8, 8>}]} {
    %c0 = arith.constant 0 : index
    %c0_0 = arith.constant 0 : index
    %0 = vector.load %arg1[%c0, %c0_0] : memref<16x10xf32, #tpu.memory_space<vmem>>, vector<16x10xf32>
    %c0_1 = arith.constant 0 : index
    %c0_2 = arith.constant 0 : index
    %1 = vector.load %arg2[%c0_1, %c0_2] : memref<10x768xf32, #tpu.memory_space<vmem>>, vector<10x768xf32>
    %cst = arith.constant dense<0.000000e+00> : vector<16x768xf32>
    %2 = tpu.matmul %0, %1, %cst {dimension_numbers = #tpu.dot_dimension_numbers<[1], [0], [0], [1], [0, 0, 1, 1], [], []>} : vector<16x10xf32>, vector<10x768xf32>, vector<16x768xf32> -> vector<16x768xf32>
    %c0_3 = arith.constant 0 : index
    %c0_4 = arith.constant 0 : index
    %3 = vector.load %arg3[%c0_3, %c0_4] : memref<1x768xf32, #tpu.memory_space<vmem>>, vector<1x768xf32>
    %4 = vector.broadcast %3 : vector<1x768xf32> to vector<16x768xf32>
    %5 = arith.addf %2, %4 : vector<16x768xf32>
    %cst_5 = arith.constant 0.000000e+00 : f32
    %6 = vector.broadcast %cst_5 : f32 to vector<8x10xf32>
    %7 = vector.extract_strided_slice %5 {offsets = [0, 0], sizes = [8, 128], strides = [1, 1]} : vector<16x768xf32> to vector<8x128xf32>
    %8 = vector.extract_strided_slice %5 {offsets = [0, 256], sizes = [8, 128], strides = [1, 1]} : vector<16x768xf32> to vector<8x128xf32>
    %9 = vector.extract_strided_slice %5 {offsets = [0, 512], sizes = [8, 128], strides = [1, 1]} : vector<16x768xf32> to vector<8x128xf32>
    %cst_6 = arith.constant dense<0.000000e+00> : vector<8x8xf32>
    %10 = tpu.matmul %7, %8, %cst_6 {dimension_numbers = #tpu.dot_dimension_numbers<[1], [1], [0], [0], [0, 0, 1, 0], [], []>} : vector<8x128xf32>, vector<8x128xf32>, vector<8x8xf32> -> vector<8x8xf32>
    %cst_7 = arith.constant dense<0xFF800000> : vector<8xf32>
    %11 = vector.multi_reduction <maximumf>, %10, %cst_7 [1] : vector<8x8xf32> to vector<8xf32>
    %12 = vector.shape_cast %11 : vector<8xf32> to vector<8x1xf32>
    %13 = vector.broadcast %12 : vector<8x1xf32> to vector<8x8xf32>
    %14 = arith.subf %10, %13 : vector<8x8xf32>
    %15 = math.exp %14 : vector<8x8xf32>
    %cst_8 = arith.constant dense<0.000000e+00> : vector<8xf32>
    %16 = vector.multi_reduction <add>, %15, %cst_8 [1] : vector<8x8xf32> to vector<8xf32>
    %17 = vector.shape_cast %16 : vector<8xf32> to vector<8x1xf32>
    %18 = vector.broadcast %17 : vector<8x1xf32> to vector<8x8xf32>
    %19 = arith.divf %15, %18 : vector<8x8xf32>
    %c0_9 = arith.constant 0 : index
    %c0_10 = arith.constant 0 : index
    %c0_11 = arith.constant 0 : index
    %c0_12 = arith.constant 0 : index
    %20 = vector.load %arg9[%c0_9, %c0_10, %c0_11, %c0_12] : memref<2x2x8x8xf32, #tpu.memory_space<vmem>>, vector<1x1x8x8xf32>
    %21 = vector.shape_cast %20 : vector<1x1x8x8xf32> to vector<8x8xf32>
    %22 = vector.shape_cast %19 : vector<8x8xf32> to vector<1x1x8x8xf32>
    tpu.vector_store %arg9[%c0_9, %c0_10, %c0_11, %c0_12], %22 {strides = array<i32>} : memref<2x2x8x8xf32, #tpu.memory_space<vmem>>, vector<1x1x8x8xf32>,
    %c0_13 = arith.constant 0 : index
    %c0_14 = arith.constant 0 : index
    %c0_15 = arith.constant 0 : index
    %23 = vector.load %arg4[%c0_13, %c0_14, %c0_15] : memref<2x128x10xf32, #tpu.memory_space<vmem>>, vector<1x128x10xf32>
    %24 = vector.shape_cast %23 : vector<1x128x10xf32> to vector<128x10xf32>
    %cst_16 = arith.constant dense<0.000000e+00> : vector<8x10xf32>
    %25 = tpu.matmul %9, %24, %cst_16 {dimension_numbers = #tpu.dot_dimension_numbers<[1], [0], [0], [1], [0, 0, 1, 1], [], []>} : vector<8x128xf32>, vector<128x10xf32>, vector<8x10xf32> -> vector<8x10xf32>
    %cst_17 = arith.constant dense<0.000000e+00> : vector<8x10xf32>
    %26 = tpu.matmul %19, %25, %cst_17 {dimension_numbers = #tpu.dot_dimension_numbers<[1], [0], [0], [1], [0, 0, 1, 1], [], []>} : vector<8x8xf32>, vector<8x10xf32>, vector<8x10xf32> -> vector<8x10xf32>
    %27 = arith.addf %6, %26 : vector<8x10xf32>
    %28 = vector.extract_strided_slice %5 {offsets = [0, 128], sizes = [8, 128], strides = [1, 1]} : vector<16x768xf32> to vector<8x128xf32>
    %29 = vector.extract_strided_slice %5 {offsets = [0, 384], sizes = [8, 128], strides = [1, 1]} : vector<16x768xf32> to vector<8x128xf32>
    %30 = vector.extract_strided_slice %5 {offsets = [0, 640], sizes = [8, 128], strides = [1, 1]} : vector<16x768xf32> to vector<8x128xf32>
    %cst_18 = arith.constant dense<0.000000e+00> : vector<8x8xf32>
    %31 = tpu.matmul %28, %29, %cst_18 {dimension_numbers = #tpu.dot_dimension_numbers<[1], [1], [0], [0], [0, 0, 1, 0], [], []>} : vector<8x128xf32>, vector<8x128xf32>, vector<8x8xf32> -> vector<8x8xf32>
    %cst_19 = arith.constant dense<0xFF800000> : vector<8xf32>
    %32 = vector.multi_reduction <maximumf>, %31, %cst_19 [1] : vector<8x8xf32> to vector<8xf32>
    %33 = vector.shape_cast %32 : vector<8xf32> to vector<8x1xf32>
    %34 = vector.broadcast %33 : vector<8x1xf32> to vector<8x8xf32>
    %35 = arith.subf %31, %34 : vector<8x8xf32>
    %36 = math.exp %35 : vector<8x8xf32>
    %cst_20 = arith.constant dense<0.000000e+00> : vector<8xf32>
    %37 = vector.multi_reduction <add>, %36, %cst_20 [1] : vector<8x8xf32> to vector<8xf32>
    %38 = vector.shape_cast %37 : vector<8xf32> to vector<8x1xf32>
    %39 = vector.broadcast %38 : vector<8x1xf32> to vector<8x8xf32>
    %40 = arith.divf %36, %39 : vector<8x8xf32>
    %c0_21 = arith.constant 0 : index
    %c1 = arith.constant 1 : index
    %c0_22 = arith.constant 0 : index
    %c0_23 = arith.constant 0 : index
    %41 = vector.load %arg9[%c0_21, %c1, %c0_22, %c0_23] : memref<2x2x8x8xf32, #tpu.memory_space<vmem>>, vector<1x1x8x8xf32>
    %42 = vector.shape_cast %41 : vector<1x1x8x8xf32> to vector<8x8xf32>
    %43 = vector.shape_cast %40 : vector<8x8xf32> to vector<1x1x8x8xf32>
    tpu.vector_store %arg9[%c0_21, %c1, %c0_22, %c0_23], %43 {strides = array<i32>} : memref<2x2x8x8xf32, #tpu.memory_space<vmem>>, vector<1x1x8x8xf32>,
    %c1_24 = arith.constant 1 : index
    %c0_25 = arith.constant 0 : index
    %c0_26 = arith.constant 0 : index
    %44 = vector.load %arg4[%c1_24, %c0_25, %c0_26] : memref<2x128x10xf32, #tpu.memory_space<vmem>>, vector<1x128x10xf32>
    %45 = vector.shape_cast %44 : vector<1x128x10xf32> to vector<128x10xf32>
    %cst_27 = arith.constant dense<0.000000e+00> : vector<8x10xf32>
    %46 = tpu.matmul %30, %45, %cst_27 {dimension_numbers = #tpu.dot_dimension_numbers<[1], [0], [0], [1], [0, 0, 1, 1], [], []>} : vector<8x128xf32>, vector<128x10xf32>, vector<8x10xf32> -> vector<8x10xf32>
    %cst_28 = arith.constant dense<0.000000e+00> : vector<8x10xf32>
    %47 = tpu.matmul %40, %46, %cst_28 {dimension_numbers = #tpu.dot_dimension_numbers<[1], [0], [0], [1], [0, 0, 1, 1], [], []>} : vector<8x8xf32>, vector<8x10xf32>, vector<8x10xf32> -> vector<8x10xf32>
    %48 = arith.addf %27, %47 : vector<8x10xf32>
    %49 = vector.extract_strided_slice %0 {offsets = [0, 0], sizes = [8, 10], strides = [1, 1]} : vector<16x10xf32> to vector<8x10xf32>
    %50 = arith.addf %49, %48 : vector<8x10xf32>
    %c0_29 = arith.constant 0 : index
    %c0_30 = arith.constant 0 : index
    %51 = vector.load %arg5[%c0_29, %c0_30] : memref<1x10xf32, #tpu.memory_space<vmem>>, vector<1x10xf32>
    %52 = vector.broadcast %51 : vector<1x10xf32> to vector<8x10xf32>
    %53 = arith.addf %50, %52 : vector<8x10xf32>
    %cst_31 = arith.constant dense<0.000000e+00> : vector<8xf32>
    %54 = vector.multi_reduction <add>, %53, %cst_31 [1] : vector<8x10xf32> to vector<8xf32>
    %55 = vector.shape_cast %54 : vector<8xf32> to vector<8x1xf32>
    %cst_32 = arith.constant 1.000000e+01 : f32
    %56 = vector.broadcast %cst_32 : f32 to vector<8x1xf32>
    %57 = arith.divf %55, %56 : vector<8x1xf32>
    %58 = vector.broadcast %57 : vector<8x1xf32> to vector<8x10xf32>
    %59 = arith.subf %53, %58 : vector<8x10xf32>
    %60 = arith.mulf %59, %59 : vector<8x10xf32>
    %cst_33 = arith.constant dense<0.000000e+00> : vector<8xf32>
    %61 = vector.multi_reduction <add>, %60, %cst_33 [1] : vector<8x10xf32> to vector<8xf32>
    %62 = vector.shape_cast %61 : vector<8xf32> to vector<8x1xf32>
    %cst_34 = arith.constant 1.000000e+01 : f32
    %63 = vector.broadcast %cst_34 : f32 to vector<8x1xf32>
    %64 = arith.divf %62, %63 : vector<8x1xf32>
    %65 = vector.broadcast %57 : vector<8x1xf32> to vector<8x10xf32>
    %66 = arith.subf %53, %65 : vector<8x10xf32>
    %cst_35 = arith.constant 9.99999997E-7 : f32
    %67 = vector.broadcast %cst_35 : f32 to vector<8x1xf32>
    %68 = arith.addf %64, %67 : vector<8x1xf32>
    %69 = math.rsqrt %68 : vector<8x1xf32>
    %70 = vector.broadcast %69 : vector<8x1xf32> to vector<8x10xf32>
    %71 = arith.mulf %66, %70 : vector<8x10xf32>
    %c0_36 = arith.constant 0 : index
    %c0_37 = arith.constant 0 : index
    %72 = vector.load %arg6[%c0_36, %c0_37] : memref<1x10xf32, #tpu.memory_space<vmem>>, vector<1x10xf32>
    %73 = vector.broadcast %72 : vector<1x10xf32> to vector<8x10xf32>
    %74 = arith.mulf %71, %73 : vector<8x10xf32>
    %c0_38 = arith.constant 0 : index
    %c0_39 = arith.constant 0 : index
    %75 = vector.load %arg7[%c0_38, %c0_39] : memref<1x10xf32, #tpu.memory_space<vmem>>, vector<1x10xf32>
    %76 = vector.broadcast %75 : vector<1x10xf32> to vector<8x10xf32>
    %77 = arith.addf %74, %76 : vector<8x10xf32>
    %c0_40 = arith.constant 0 : index
    %c0_41 = arith.constant 0 : index
    %78 = vector.load %arg8[%c0_40, %c0_41] : memref<16x10xf32, #tpu.memory_space<vmem>>, vector<8x10xf32>
    tpu.vector_store %arg8[%c0_40, %c0_41], %77 {strides = array<i32>} : memref<16x10xf32, #tpu.memory_space<vmem>>, vector<8x10xf32>,
    %cst_42 = arith.constant 0.000000e+00 : f32
    %79 = vector.broadcast %cst_42 : f32 to vector<8x10xf32>
    %80 = vector.extract_strided_slice %5 {offsets = [8, 0], sizes = [8, 128], strides = [1, 1]} : vector<16x768xf32> to vector<8x128xf32>
    %81 = vector.extract_strided_slice %5 {offsets = [8, 256], sizes = [8, 128], strides = [1, 1]} : vector<16x768xf32> to vector<8x128xf32>
    %82 = vector.extract_strided_slice %5 {offsets = [8, 512], sizes = [8, 128], strides = [1, 1]} : vector<16x768xf32> to vector<8x128xf32>
    %cst_43 = arith.constant dense<0.000000e+00> : vector<8x8xf32>
    %83 = tpu.matmul %80, %81, %cst_43 {dimension_numbers = #tpu.dot_dimension_numbers<[1], [1], [0], [0], [0, 0, 1, 0], [], []>} : vector<8x128xf32>, vector<8x128xf32>, vector<8x8xf32> -> vector<8x8xf32>
    %cst_44 = arith.constant dense<0xFF800000> : vector<8xf32>
    %84 = vector.multi_reduction <maximumf>, %83, %cst_44 [1] : vector<8x8xf32> to vector<8xf32>
    %85 = vector.shape_cast %84 : vector<8xf32> to vector<8x1xf32>
    %86 = vector.broadcast %85 : vector<8x1xf32> to vector<8x8xf32>
    %87 = arith.subf %83, %86 : vector<8x8xf32>
    %88 = math.exp %87 : vector<8x8xf32>
    %cst_45 = arith.constant dense<0.000000e+00> : vector<8xf32>
    %89 = vector.multi_reduction <add>, %88, %cst_45 [1] : vector<8x8xf32> to vector<8xf32>
    %90 = vector.shape_cast %89 : vector<8xf32> to vector<8x1xf32>
    %91 = vector.broadcast %90 : vector<8x1xf32> to vector<8x8xf32>
    %92 = arith.divf %88, %91 : vector<8x8xf32>
    %c1_46 = arith.constant 1 : index
    %c0_47 = arith.constant 0 : index
    %c0_48 = arith.constant 0 : index
    %c0_49 = arith.constant 0 : index
    %93 = vector.load %arg9[%c1_46, %c0_47, %c0_48, %c0_49] : memref<2x2x8x8xf32, #tpu.memory_space<vmem>>, vector<1x1x8x8xf32>
    %94 = vector.shape_cast %93 : vector<1x1x8x8xf32> to vector<8x8xf32>
    %95 = vector.shape_cast %92 : vector<8x8xf32> to vector<1x1x8x8xf32>
    tpu.vector_store %arg9[%c1_46, %c0_47, %c0_48, %c0_49], %95 {strides = array<i32>} : memref<2x2x8x8xf32, #tpu.memory_space<vmem>>, vector<1x1x8x8xf32>,
    %c0_50 = arith.constant 0 : index
    %c0_51 = arith.constant 0 : index
    %c0_52 = arith.constant 0 : index
    %96 = vector.load %arg4[%c0_50, %c0_51, %c0_52] : memref<2x128x10xf32, #tpu.memory_space<vmem>>, vector<1x128x10xf32>
    %97 = vector.shape_cast %96 : vector<1x128x10xf32> to vector<128x10xf32>
    %cst_53 = arith.constant dense<0.000000e+00> : vector<8x10xf32>
    %98 = tpu.matmul %82, %97, %cst_53 {dimension_numbers = #tpu.dot_dimension_numbers<[1], [0], [0], [1], [0, 0, 1, 1], [], []>} : vector<8x128xf32>, vector<128x10xf32>, vector<8x10xf32> -> vector<8x10xf32>
    %cst_54 = arith.constant dense<0.000000e+00> : vector<8x10xf32>
    %99 = tpu.matmul %92, %98, %cst_54 {dimension_numbers = #tpu.dot_dimension_numbers<[1], [0], [0], [1], [0, 0, 1, 1], [], []>} : vector<8x8xf32>, vector<8x10xf32>, vector<8x10xf32> -> vector<8x10xf32>
    %100 = arith.addf %79, %99 : vector<8x10xf32>
    %101 = vector.extract_strided_slice %5 {offsets = [8, 128], sizes = [8, 128], strides = [1, 1]} : vector<16x768xf32> to vector<8x128xf32>
    %102 = vector.extract_strided_slice %5 {offsets = [8, 384], sizes = [8, 128], strides = [1, 1]} : vector<16x768xf32> to vector<8x128xf32>
    %103 = vector.extract_strided_slice %5 {offsets = [8, 640], sizes = [8, 128], strides = [1, 1]} : vector<16x768xf32> to vector<8x128xf32>
    %cst_55 = arith.constant dense<0.000000e+00> : vector<8x8xf32>
    %104 = tpu.matmul %101, %102, %cst_55 {dimension_numbers = #tpu.dot_dimension_numbers<[1], [1], [0], [0], [0, 0, 1, 0], [], []>} : vector<8x128xf32>, vector<8x128xf32>, vector<8x8xf32> -> vector<8x8xf32>
    %cst_56 = arith.constant dense<0xFF800000> : vector<8xf32>
    %105 = vector.multi_reduction <maximumf>, %104, %cst_56 [1] : vector<8x8xf32> to vector<8xf32>
    %106 = vector.shape_cast %105 : vector<8xf32> to vector<8x1xf32>
    %107 = vector.broadcast %106 : vector<8x1xf32> to vector<8x8xf32>
    %108 = arith.subf %104, %107 : vector<8x8xf32>
    %109 = math.exp %108 : vector<8x8xf32>
    %cst_57 = arith.constant dense<0.000000e+00> : vector<8xf32>
    %110 = vector.multi_reduction <add>, %109, %cst_57 [1] : vector<8x8xf32> to vector<8xf32>
    %111 = vector.shape_cast %110 : vector<8xf32> to vector<8x1xf32>
    %112 = vector.broadcast %111 : vector<8x1xf32> to vector<8x8xf32>
    %113 = arith.divf %109, %112 : vector<8x8xf32>
    %c1_58 = arith.constant 1 : index
    %c1_59 = arith.constant 1 : index
    %c0_60 = arith.constant 0 : index
    %c0_61 = arith.constant 0 : index
    %114 = vector.load %arg9[%c1_58, %c1_59, %c0_60, %c0_61] : memref<2x2x8x8xf32, #tpu.memory_space<vmem>>, vector<1x1x8x8xf32>
    %115 = vector.shape_cast %114 : vector<1x1x8x8xf32> to vector<8x8xf32>
    %116 = vector.shape_cast %113 : vector<8x8xf32> to vector<1x1x8x8xf32>
    tpu.vector_store %arg9[%c1_58, %c1_59, %c0_60, %c0_61], %116 {strides = array<i32>} : memref<2x2x8x8xf32, #tpu.memory_space<vmem>>, vector<1x1x8x8xf32>,
    %c1_62 = arith.constant 1 : index
    %c0_63 = arith.constant 0 : index
    %c0_64 = arith.constant 0 : index
    %117 = vector.load %arg4[%c1_62, %c0_63, %c0_64] : memref<2x128x10xf32, #tpu.memory_space<vmem>>, vector<1x128x10xf32>
    %118 = vector.shape_cast %117 : vector<1x128x10xf32> to vector<128x10xf32>
    %cst_65 = arith.constant dense<0.000000e+00> : vector<8x10xf32>
    %119 = tpu.matmul %103, %118, %cst_65 {dimension_numbers = #tpu.dot_dimension_numbers<[1], [0], [0], [1], [0, 0, 1, 1], [], []>} : vector<8x128xf32>, vector<128x10xf32>, vector<8x10xf32> -> vector<8x10xf32>
    %cst_66 = arith.constant dense<0.000000e+00> : vector<8x10xf32>
    %120 = tpu.matmul %113, %119, %cst_66 {dimension_numbers = #tpu.dot_dimension_numbers<[1], [0], [0], [1], [0, 0, 1, 1], [], []>} : vector<8x8xf32>, vector<8x10xf32>, vector<8x10xf32> -> vector<8x10xf32>
    %121 = arith.addf %100, %120 : vector<8x10xf32>
    %122 = vector.extract_strided_slice %0 {offsets = [8, 0], sizes = [8, 10], strides = [1, 1]} : vector<16x10xf32> to vector<8x10xf32>
    %123 = arith.addf %122, %121 : vector<8x10xf32>
    %c0_67 = arith.constant 0 : index
    %c0_68 = arith.constant 0 : index
    %124 = vector.load %arg5[%c0_67, %c0_68] : memref<1x10xf32, #tpu.memory_space<vmem>>, vector<1x10xf32>
    %125 = vector.broadcast %124 : vector<1x10xf32> to vector<8x10xf32>
    %126 = arith.addf %123, %125 : vector<8x10xf32>
    %cst_69 = arith.constant dense<0.000000e+00> : vector<8xf32>
    %127 = vector.multi_reduction <add>, %126, %cst_69 [1] : vector<8x10xf32> to vector<8xf32>
    %128 = vector.shape_cast %127 : vector<8xf32> to vector<8x1xf32>
    %cst_70 = arith.constant 1.000000e+01 : f32
    %129 = vector.broadcast %cst_70 : f32 to vector<8x1xf32>
    %130 = arith.divf %128, %129 : vector<8x1xf32>
    %131 = vector.broadcast %130 : vector<8x1xf32> to vector<8x10xf32>
    %132 = arith.subf %126, %131 : vector<8x10xf32>
    %133 = arith.mulf %132, %132 : vector<8x10xf32>
    %cst_71 = arith.constant dense<0.000000e+00> : vector<8xf32>
    %134 = vector.multi_reduction <add>, %133, %cst_71 [1] : vector<8x10xf32> to vector<8xf32>
    %135 = vector.shape_cast %134 : vector<8xf32> to vector<8x1xf32>
    %cst_72 = arith.constant 1.000000e+01 : f32
    %136 = vector.broadcast %cst_72 : f32 to vector<8x1xf32>
    %137 = arith.divf %135, %136 : vector<8x1xf32>
    %138 = vector.broadcast %130 : vector<8x1xf32> to vector<8x10xf32>
    %139 = arith.subf %126, %138 : vector<8x10xf32>
    %cst_73 = arith.constant 9.99999997E-7 : f32
    %140 = vector.broadcast %cst_73 : f32 to vector<8x1xf32>
    %141 = arith.addf %137, %140 : vector<8x1xf32>
    %142 = math.rsqrt %141 : vector<8x1xf32>
    %143 = vector.broadcast %142 : vector<8x1xf32> to vector<8x10xf32>
    %144 = arith.mulf %139, %143 : vector<8x10xf32>
    %c0_74 = arith.constant 0 : index
    %c0_75 = arith.constant 0 : index
    %145 = vector.load %arg6[%c0_74, %c0_75] : memref<1x10xf32, #tpu.memory_space<vmem>>, vector<1x10xf32>
    %146 = vector.broadcast %145 : vector<1x10xf32> to vector<8x10xf32>
    %147 = arith.mulf %144, %146 : vector<8x10xf32>
    %c0_76 = arith.constant 0 : index
    %c0_77 = arith.constant 0 : index
    %148 = vector.load %arg7[%c0_76, %c0_77] : memref<1x10xf32, #tpu.memory_space<vmem>>, vector<1x10xf32>
    %149 = vector.broadcast %148 : vector<1x10xf32> to vector<8x10xf32>
    %150 = arith.addf %147, %149 : vector<8x10xf32>
    %c8 = arith.constant 8 : index
    %c0_78 = arith.constant 0 : index
    %151 = vector.load %arg8[%c8, %c0_78] : memref<16x10xf32, #tpu.memory_space<vmem>>, vector<8x10xf32>
    tpu.vector_store %arg8[%c8, %c0_78], %150 {strides = array<i32>} : memref<16x10xf32, #tpu.memory_space<vmem>>, vector<8x10xf32>,
    return
  }
  func.func @transform_0(%arg0: i32) -> (i32, i32) {
    %c0_i32 = arith.constant 0 : i32
    %c0_i32_0 = arith.constant 0 : i32
    %c0_i32_1 = arith.constant 0 : i32
    return %c0_i32, %c0_i32_0 : i32, i32
  }
  func.func @transform_1(%arg0: i32) -> (i32, i32) {
    %c0_i32 = arith.constant 0 : i32
    %c0_i32_0 = arith.constant 0 : i32
    %c0_i32_1 = arith.constant 0 : i32
    return %c0_i32, %c0_i32_0 : i32, i32
  }
  func.func @transform_2(%arg0: i32) -> (i32, i32) {
    %c0_i32 = arith.constant 0 : i32
    %c0_i32_0 = arith.constant 0 : i32
    %c0_i32_1 = arith.constant 0 : i32
    return %c0_i32, %c0_i32_0 : i32, i32
  }
  func.func @transform_3(%arg0: i32) -> (i32, i32, i32) {
    %c0_i32 = arith.constant 0 : i32
    %c0_i32_0 = arith.constant 0 : i32
    %c0_i32_1 = arith.constant 0 : i32
    %c0_i32_2 = arith.constant 0 : i32
    return %c0_i32, %c0_i32_0, %c0_i32_1 : i32, i32, i32
  }
  func.func @transform_4(%arg0: i32) -> (i32, i32) {
    %c0_i32 = arith.constant 0 : i32
    %c0_i32_0 = arith.constant 0 : i32
    %c0_i32_1 = arith.constant 0 : i32
    return %c0_i32, %c0_i32_0 : i32, i32
  }
  func.func @transform_5(%arg0: i32) -> (i32, i32) {
    %c0_i32 = arith.constant 0 : i32
    %c0_i32_0 = arith.constant 0 : i32
    %c0_i32_1 = arith.constant 0 : i32
    return %c0_i32, %c0_i32_0 : i32, i32
  }
  func.func @transform_6(%arg0: i32) -> (i32, i32) {
    %c0_i32 = arith.constant 0 : i32
    %c0_i32_0 = arith.constant 0 : i32
    %c0_i32_1 = arith.constant 0 : i32
    return %c0_i32, %c0_i32_0 : i32, i32
  }
  func.func @transform_7(%arg0: i32) -> (i32, i32) {
    %c0_i32 = arith.constant 0 : i32
    %c0_i32_0 = arith.constant 0 : i32
    %c0_i32_1 = arith.constant 0 : i32
    return %c0_i32, %c0_i32_0 : i32, i32
  }
  func.func @transform_8(%arg0: i32) -> (i32, i32, i32, i32) {
    %c0_i32 = arith.constant 0 : i32
    %c0_i32_0 = arith.constant 0 : i32
    %c0_i32_1 = arith.constant 0 : i32
    %c0_i32_2 = arith.constant 0 : i32
    %c0_i32_3 = arith.constant 0 : i32
    return %c0_i32, %c0_i32_0, %c0_i32_1, %c0_i32_2 : i32, i32, i32, i32
  }
}

</mosaic_0001>

<llo_original>
// kernel: tpu_custom_call.1
$region0: #{tpu_custom_call.1}
  #allocation0 [shape = 'u32[]', space=smem, size = 0x4, offset = 0x4, fixed_abs, tag = 'smem constant byte address 0x4 - core index']
  #allocation1 [shape = 'u32[144,128]{1,0:T(1,128)}', space=vmem, size = 0x12000, scoped, tag = 'internal scratch']
  %s0 = inlined_call_operand.vmem [shape: f32[16,10], index: 0, kind: input, shape index: {}]
  %s1 = inlined_call_operand.vmem [shape: f32[10,768], index: 1, kind: input, shape index: {}]
  %s2 = inlined_call_operand.vmem [shape: f32[1,768], index: 2, kind: input, shape index: {}]
  %s3 = inlined_call_operand.vmem [shape: f32[2,128,10], index: 3, kind: input, shape index: {}]
  %s4 = inlined_call_operand.vmem [shape: f32[1,10], index: 4, kind: input, shape index: {}]
  %s5 = inlined_call_operand.vmem [shape: f32[1,10], index: 5, kind: input, shape index: {}]
  %s6 = inlined_call_operand.vmem [shape: f32[1,10], index: 6, kind: input, shape index: {}]
  %s7 = inlined_call_operand.hbm [shape: f32[16,10], index: 7, kind: output, shape index: {0}]
  %s8 = inlined_call_operand.hbm [shape: f32[2,2,8,8], index: 8, kind: output, shape index: {1}]
  %9 = xla_tuple %s7, %s8
  %s10 = sld [smem:[#allocation0]]
  $region46: #{tpu_custom_call.1} parent=0
    _
  %s12 = ssub.s32 1, %s10
  %s13 = scalar_select 0, %s12, %s10
  $region1: #{tpu_custom_call.1} parent=0
    #allocation2 [shape = 'u8[8192]{0}', space=vmem, size = 0x2000, scoped, tag = 'output window, operand 0, single buffered']
    #allocation3 [shape = 's32[1]{0}', space=sflag, size = 0x4, scoped, tag = 'scoped memory for tpu_custom_call.1']
    #allocation4 [shape = 'u8[16384]{0}', space=vmem, size = 0x4000, scoped, tag = 'output window, operand 1, single buffered']
    #allocation5 [shape = 's32[1]{0}', space=sflag, size = 0x4, scoped, tag = 'scoped memory for tpu_custom_call.1']
    %14 = vsyncpa [#allocation3], 0
    %15 = vsyncpa [#allocation5], 0
    // Predicated region
    $region2: #{tpu_custom_call.1} parent=1 // pred_check
      _
    $region3: #{tpu_custom_call.1} parent=1 // pred_check_branch
      %17 = sbr.rel (0) target = $region5
    $region4: #{tpu_custom_call.1} parent=1 // pred_region
      _
    $region5: #{tpu_custom_call.1} parent=1 // pred_fallthru
      _
    // Predicated region
    $region6: #{tpu_custom_call.1} parent=1 // pred_check
      _
    $region7: #{tpu_custom_call.1} parent=1 // pred_check_branch
      %19 = sbr.rel (0) target = $region9
    $region8: #{tpu_custom_call.1} parent=1 // pred_region
      _
    $region9: #{tpu_custom_call.1} parent=1 // pred_fallthru
      _
    // Predicated region
    $region10: #{tpu_custom_call.1} parent=1 // pred_check
      _
    $region11: #{tpu_custom_call.1} parent=1 // pred_check_branch
      %21 = sbr.rel (0) target = $region13
    $region12: #{tpu_custom_call.1} parent=1 // pred_region
      _
    $region13: #{tpu_custom_call.1} parent=1 // pred_fallthru
      _
    // Predicated region
    $region14: #{tpu_custom_call.1} parent=1 // pred_check
      _
    $region15: #{tpu_custom_call.1} parent=1 // pred_check_branch
      %23 = sbr.rel (0) target = $region17
    $region16: #{tpu_custom_call.1} parent=1 // pred_region
      _
    $region17: #{tpu_custom_call.1} parent=1 // pred_fallthru
      _
    // Predicated region
    $region18: #{tpu_custom_call.1} parent=1 // pred_check
      _
    $region19: #{tpu_custom_call.1} parent=1 // pred_check_branch
      %25 = sbr.rel (0) target = $region21
    $region20: #{tpu_custom_call.1} parent=1 // pred_region
      _
    $region21: #{tpu_custom_call.1} parent=1 // pred_fallthru
      _
    // Predicated region
    $region22: #{tpu_custom_call.1} parent=1 // pred_check
      _
    $region23: #{tpu_custom_call.1} parent=1 // pred_check_branch
      %27 = sbr.rel (0) target = $region25
    $region24: #{tpu_custom_call.1} parent=1 // pred_region
      _
    $region25: #{tpu_custom_call.1} parent=1 // pred_fallthru
      _
    // Predicated region
    $region26: #{tpu_custom_call.1} parent=1 // pred_check
      _
    $region27: #{tpu_custom_call.1} parent=1 // pred_check_branch
      %29 = sbr.rel (0) target = $region29
    $region28: #{tpu_custom_call.1} parent=1 // pred_region
      _
    $region29: #{tpu_custom_call.1} parent=1 // pred_fallthru
      _
    %v30 = vld [vmem:[%s0] sm:$0xff]
    %v31 = vld [vmem:[%s0 + $0x8] sm:$0xff]
    %v32 = vld [vmem:[%s1] sm:$0xff]
    %v33 = vld [vmem:[%s1 + $0x8] sm:$0xff]
    %v34 = vld [vmem:[%s1 + $0x10] sm:$0xff]
    %v35 = vld [vmem:[%s1 + $0x18] sm:$0xff]
    %v36 = vld [vmem:[%s1 + $0x20] sm:$0xff]
    %v37 = vld [vmem:[%s1 + $0x28] sm:$0xff]
    %v38 = vld [vmem:[%s1 + $0x30] sm:$0x3]
    %v39 = vld [vmem:[%s1 + $0x38] sm:$0x3]
    %v40 = vld [vmem:[%s1 + $0x40] sm:$0x3]
    %v41 = vld [vmem:[%s1 + $0x48] sm:$0x3]
    %v42 = vld [vmem:[%s1 + $0x50] sm:$0x3]
    %v43 = vld [vmem:[%s1 + $0x58] sm:$0x3]
    %v44 = vld [vmem:[%s2] sm:$0x3f]
    %v46 = vlaneseq
    %v47 = vshrl.u32 %v46, 7
    %v48 = vsub.s32 0, %v47
    %v49 = vrot.slane %v44, %v48
    %v50 = vlaneseq
    %v51 = vshrl.u32 %v50, 7
    %v52 = vsub.s32 1, %v51
    %v53 = vrot.slane %v44, %v52
    %v54 = vlaneseq
    %v55 = vshrl.u32 %v54, 7
    %v56 = vsub.s32 2, %v55
    %v57 = vrot.slane %v44, %v56
    %v58 = vlaneseq
    %v59 = vshrl.u32 %v58, 7
    %v60 = vsub.s32 3, %v59
    %v61 = vrot.slane %v44, %v60
    %v62 = vlaneseq
    %v63 = vshrl.u32 %v62, 7
    %v64 = vsub.s32 4, %v63
    %v65 = vrot.slane %v44, %v64
    %v66 = vlaneseq
    %v67 = vshrl.u32 %v66, 7
    %v68 = vsub.s32 5, %v67
    %v69 = vrot.slane %v44, %v68
    %vm76 = vcmask 80896
    %v78 = vsel %vm76, %v30, 0
    %v81 = vsel %vm76, %v31, 0
    %vm83 = vcmask 1041408
    %v85 = vsel %vm83, %v38, 0
    %v88 = vsel %vm83, %v39, 0
    %v91 = vsel %vm83, %v40, 0
    %v94 = vsel %vm83, %v41, 0
    %v97 = vsel %vm83, %v42, 0
    %v100 = vsel %vm83, %v43, 0
    %102 = vmatprep.subr.mxu0 0.0
    %103 = vmatpush1.msra.mxu0 0.0
    %104 = vmatprep.subr.mxu0 0.0
    %105 = vmatpush1.msra.mxu0 0.0
    %106 = vmatprep.subr.mxu0 0.0
    %107 = vmatpush1.msra.mxu0 0.0
    %108 = vmatprep.subr.mxu0 0.0
    %109 = vmatpush1.msra.mxu0 0.0
    %110 = vmatprep.subr.mxu0 0.0
    %111 = vmatpush1.msra.mxu0 0.0
    %112 = vmatprep.subr.mxu0 0.0
    %113 = vmatpush1.msra.mxu0 0.0
    %114 = vmatprep.subr.mxu0 0.0
    %115 = vmatpush1.msra.mxu0 0.0
    %116 = vmatprep.subr.mxu0 0.0
    %117 = vmatpush1.msra.mxu0 0.0
    %118 = vmatprep.subr.mxu0 0.0
    %119 = vmatpush1.msra.mxu0 0.0
    %120 = vmatprep.subr.mxu0 0.0
    %121 = vmatpush1.msra.mxu0 0.0
    %122 = vmatprep.subr.mxu0 0.0
    %123 = vmatpush1.msra.mxu0 0.0
    %124 = vmatprep.subr.mxu0 0.0
    %125 = vmatpush1.msra.mxu0 0.0
    %126 = vmatprep.subr.mxu0 0.0
    %127 = vmatpush1.msra.mxu0 0.0
    %128 = vmatprep.subr.mxu0 0.0
    %129 = vmatpush1.msra.mxu0 0.0
    %130 = vmatprep.subr.mxu0 %v88
    %131 = vmatpush1.msra.mxu0 %v85
    %132 = vmatprep.subr.mxu0 %v33
    %133 = vmatpush1.msra.mxu0 %v32
    %134 = vmatprep.subr.mxu0 0.0
    %135 = vmatpush2.msra.mxu0 0.0
    %136 = vmatprep.subr.mxu0 0.0
    %137 = vmatpush2.msra.mxu0 0.0
    %138 = vmatprep.subr.mxu0 0.0
    %139 = vmatpush2.msra.mxu0 0.0
    %140 = vmatprep.subr.mxu0 0.0
    %141 = vmatpush2.msra.mxu0 0.0
    %142 = vmatprep.subr.mxu0 0.0
    %143 = vmatpush2.msra.mxu0 0.0
    %144 = vmatprep.subr.mxu0 0.0
    %145 = vmatpush2.msra.mxu0 0.0
    %146 = vmatprep.subr.mxu0 0.0
    %147 = vmatpush2.msra.mxu0 0.0
    %148 = vmatprep.subr.mxu0 0.0
    %149 = vmatpush2.msra.mxu0 0.0
    %150 = vmatprep.subr.mxu0 0.0
    %151 = vmatpush2.msra.mxu0 0.0
    %152 = vmatprep.subr.mxu0 0.0
    %153 = vmatpush2.msra.mxu0 0.0
    %154 = vmatprep.subr.mxu0 0.0
    %155 = vmatpush2.msra.mxu0 0.0
    %156 = vmatprep.subr.mxu0 0.0
    %157 = vmatpush2.msra.mxu0 0.0
    %158 = vmatprep.subr.mxu0 0.0
    %159 = vmatpush2.msra.mxu0 0.0
    %160 = vmatprep.subr.mxu0 0.0
    %161 = vmatpush2.msra.mxu0 0.0
    %162 = vmatprep.subr.mxu0 0.0
    %163 = vmatpush2.msra.mxu0 0.0
    %164 = vmatprep.subr.mxu0 0.0
    %165 = vmatpush2.msra.mxu0 0.0
    %166 = vmatprep.mubr.f32.mxu0 0.0
    %167 = vmatmul.mubr.f32.gmra.mxu0 %v78
    %v168 = vpop.f32.mrf.mxu0
    %v169 = vadd.f32 %v49, %v168
    %v170 = vpop.f32.mrf.mxu0
    %v171 = vadd.f32 %v53, %v170
    %172 = vmatprep.mubr.f32.mxu0 0.0
    %173 = vmatmul.mubr.f32.gmra.mxu0 %v81
    %v174 = vpop.f32.mrf.mxu0
    %v175 = vadd.f32 %v49, %v174
    %v176 = vpop.f32.mrf.mxu0
    %v177 = vadd.f32 %v53, %v176
    %178 = vdwg.mxu0
    %179 = vmatprep.subr.mxu0 0.0
    %180 = vmatpush1.msra.mxu0 0.0
    %181 = vmatprep.subr.mxu0 0.0
    %182 = vmatpush1.msra.mxu0 0.0
    %183 = vmatprep.subr.mxu0 0.0
    %184 = vmatpush1.msra.mxu0 0.0
    %185 = vmatprep.subr.mxu0 0.0
    %186 = vmatpush1.msra.mxu0 0.0
    %187 = vmatprep.subr.mxu0 0.0
    %188 = vmatpush1.msra.mxu0 0.0
    %189 = vmatprep.subr.mxu0 0.0
    %190 = vmatpush1.msra.mxu0 0.0
    %191 = vmatprep.subr.mxu0 0.0
    %192 = vmatpush1.msra.mxu0 0.0
    %193 = vmatprep.subr.mxu0 0.0
    %194 = vmatpush1.msra.mxu0 0.0
    %195 = vmatprep.subr.mxu0 0.0
    %196 = vmatpush1.msra.mxu0 0.0
    %197 = vmatprep.subr.mxu0 0.0
    %198 = vmatpush1.msra.mxu0 0.0
    %199 = vmatprep.subr.mxu0 0.0
    %200 = vmatpush1.msra.mxu0 0.0
    %201 = vmatprep.subr.mxu0 0.0
    %202 = vmatpush1.msra.mxu0 0.0
    %203 = vmatprep.subr.mxu0 0.0
    %204 = vmatpush1.msra.mxu0 0.0
    %205 = vmatprep.subr.mxu0 0.0
    %206 = vmatpush1.msra.mxu0 0.0
    %207 = vmatprep.subr.mxu0 %v94
    %208 = vmatpush1.msra.mxu0 %v91
    %209 = vmatprep.subr.mxu0 %v35
    %210 = vmatpush1.msra.mxu0 %v34
    %211 = vmatprep.subr.mxu0 0.0
    %212 = vmatpush2.msra.mxu0 0.0
    %213 = vmatprep.subr.mxu0 0.0
    %214 = vmatpush2.msra.mxu0 0.0
    %215 = vmatprep.subr.mxu0 0.0
    %216 = vmatpush2.msra.mxu0 0.0
    %217 = vmatprep.subr.mxu0 0.0
    %218 = vmatpush2.msra.mxu0 0.0
    %219 = vmatprep.subr.mxu0 0.0
    %220 = vmatpush2.msra.mxu0 0.0
    %221 = vmatprep.subr.mxu0 0.0
    %222 = vmatpush2.msra.mxu0 0.0
    %223 = vmatprep.subr.mxu0 0.0
    %224 = vmatpush2.msra.mxu0 0.0
    %225 = vmatprep.subr.mxu0 0.0
    %226 = vmatpush2.msra.mxu0 0.0
    %227 = vmatprep.subr.mxu0 0.0
    %228 = vmatpush2.msra.mxu0 0.0
    %229 = vmatprep.subr.mxu0 0.0
    %230 = vmatpush2.msra.mxu0 0.0
    %231 = vmatprep.subr.mxu0 0.0
    %232 = vmatpush2.msra.mxu0 0.0
    %233 = vmatprep.subr.mxu0 0.0
    %234 = vmatpush2.msra.mxu0 0.0
    %235 = vmatprep.subr.mxu0 0.0
    %236 = vmatpush2.msra.mxu0 0.0
    %237 = vmatprep.subr.mxu0 0.0
    %238 = vmatpush2.msra.mxu0 0.0
    %239 = vmatprep.subr.mxu0 0.0
    %240 = vmatpush2.msra.mxu0 0.0
    %241 = vmatprep.subr.mxu0 0.0
    %242 = vmatpush2.msra.mxu0 0.0
    %243 = vmatprep.mubr.f32.mxu0 0.0
    %244 = vmatmul.mubr.f32.gmra.mxu0 %v78
    %v245 = vpop.f32.mrf.mxu0
    %v246 = vadd.f32 %v57, %v245
    %v247 = vpop.f32.mrf.mxu0
    %v248 = vadd.f32 %v61, %v247
    %249 = vmatprep.mubr.f32.mxu0 0.0
    %250 = vmatmul.mubr.f32.gmra.mxu0 %v81
    %v251 = vpop.f32.mrf.mxu0
    %v252 = vadd.f32 %v57, %v251
    %v253 = vpop.f32.mrf.mxu0
    %v254 = vadd.f32 %v61, %v253
    %255 = vdwg.mxu0
    %256 = vmatprep.subr.mxu0 0.0
    %257 = vmatpush1.msra.mxu0 0.0
    %258 = vmatprep.subr.mxu0 0.0
    %259 = vmatpush1.msra.mxu0 0.0
    %260 = vmatprep.subr.mxu0 0.0
    %261 = vmatpush1.msra.mxu0 0.0
    %262 = vmatprep.subr.mxu0 0.0
    %263 = vmatpush1.msra.mxu0 0.0
    %264 = vmatprep.subr.mxu0 0.0
    %265 = vmatpush1.msra.mxu0 0.0
    %266 = vmatprep.subr.mxu0 0.0
    %267 = vmatpush1.msra.mxu0 0.0
    %268 = vmatprep.subr.mxu0 0.0
    %269 = vmatpush1.msra.mxu0 0.0
    %270 = vmatprep.subr.mxu0 0.0
    %271 = vmatpush1.msra.mxu0 0.0
    %272 = vmatprep.subr.mxu0 0.0
    %273 = vmatpush1.msra.mxu0 0.0
    %274 = vmatprep.subr.mxu0 0.0
    %275 = vmatpush1.msra.mxu0 0.0
    %276 = vmatprep.subr.mxu0 0.0
    %277 = vmatpush1.msra.mxu0 0.0
    %278 = vmatprep.subr.mxu0 0.0
    %279 = vmatpush1.msra.mxu0 0.0
    %280 = vmatprep.subr.mxu0 0.0
    %281 = vmatpush1.msra.mxu0 0.0
    %282 = vmatprep.subr.mxu0 0.0
    %283 = vmatpush1.msra.mxu0 0.0
    %284 = vmatprep.subr.mxu0 %v100
    %285 = vmatpush1.msra.mxu0 %v97
    %286 = vmatprep.subr.mxu0 %v37
    %287 = vmatpush1.msra.mxu0 %v36
    %288 = vmatprep.subr.mxu0 0.0
    %289 = vmatpush2.msra.mxu0 0.0
    %290 = vmatprep.subr.mxu0 0.0
    %291 = vmatpush2.msra.mxu0 0.0
    %292 = vmatprep.subr.mxu0 0.0
    %293 = vmatpush2.msra.mxu0 0.0
    %294 = vmatprep.subr.mxu0 0.0
    %295 = vmatpush2.msra.mxu0 0.0
    %296 = vmatprep.subr.mxu0 0.0
    %297 = vmatpush2.msra.mxu0 0.0
    %298 = vmatprep.subr.mxu0 0.0
    %299 = vmatpush2.msra.mxu0 0.0
    %300 = vmatprep.subr.mxu0 0.0
    %301 = vmatpush2.msra.mxu0 0.0
    %302 = vmatprep.subr.mxu0 0.0
    %303 = vmatpush2.msra.mxu0 0.0
    %304 = vmatprep.subr.mxu0 0.0
    %305 = vmatpush2.msra.mxu0 0.0
    %306 = vmatprep.subr.mxu0 0.0
    %307 = vmatpush2.msra.mxu0 0.0
    %308 = vmatprep.subr.mxu0 0.0
    %309 = vmatpush2.msra.mxu0 0.0
    %310 = vmatprep.subr.mxu0 0.0
    %311 = vmatpush2.msra.mxu0 0.0
    %312 = vmatprep.subr.mxu0 0.0
    %313 = vmatpush2.msra.mxu0 0.0
    %314 = vmatprep.subr.mxu0 0.0
    %315 = vmatpush2.msra.mxu0 0.0
    %316 = vmatprep.subr.mxu0 0.0
    %317 = vmatpush2.msra.mxu0 0.0
    %318 = vmatprep.subr.mxu0 0.0
    %319 = vmatpush2.msra.mxu0 0.0
    %320 = vmatprep.mubr.f32.mxu0 0.0
    %321 = vmatmul.mubr.f32.gmra.mxu0 %v78
    %v322 = vpop.f32.mrf.mxu0
    %v323 = vadd.f32 %v65, %v322
    %v324 = vpop.f32.mrf.mxu0
    %v325 = vadd.f32 %v69, %v324
    %326 = vmatprep.mubr.f32.mxu0 0.0
    %327 = vmatmul.mubr.f32.gmra.mxu0 %v81
    %v328 = vpop.f32.mrf.mxu0
    %v329 = vadd.f32 %v65, %v328
    %v330 = vpop.f32.mrf.mxu0
    %v331 = vadd.f32 %v69, %v330
    %332 = vdwg.mxu0
    %333 = vmatprep.subr.mxu0 0.0
    %334 = vmatpush1.xpose.msra.mxu0 0.0
    %335 = vmatprep.subr.mxu0 0.0
    %336 = vmatpush1.xpose.msra.mxu0 0.0
    %337 = vmatprep.subr.mxu0 0.0
    %338 = vmatpush1.xpose.msra.mxu0 0.0
    %339 = vmatprep.subr.mxu0 0.0
    %340 = vmatpush1.xpose.msra.mxu0 0.0
    %341 = vmatprep.subr.mxu0 0.0
    %342 = vmatpush1.xpose.msra.mxu0 0.0
    %343 = vmatprep.subr.mxu0 0.0
    %344 = vmatpush1.xpose.msra.mxu0 0.0
    %345 = vmatprep.subr.mxu0 0.0
    %346 = vmatpush1.xpose.msra.mxu0 0.0
    %347 = vmatprep.subr.mxu0 0.0
    %348 = vmatpush1.xpose.msra.mxu0 0.0
    %349 = vmatprep.subr.mxu0 0.0
    %350 = vmatpush1.xpose.msra.mxu0 0.0
    %351 = vmatprep.subr.mxu0 0.0
    %352 = vmatpush1.xpose.msra.mxu0 0.0
    %353 = vmatprep.subr.mxu0 0.0
    %354 = vmatpush1.xpose.msra.mxu0 0.0
    %355 = vmatprep.subr.mxu0 0.0
    %356 = vmatpush1.xpose.msra.mxu0 0.0
    %357 = vmatprep.subr.mxu0 0.0
    %358 = vmatpush1.xpose.msra.mxu0 0.0
    %359 = vmatprep.subr.mxu0 0.0
    %360 = vmatpush1.xpose.msra.mxu0 0.0
    %361 = vmatprep.subr.mxu0 0.0
    %362 = vmatpush1.xpose.msra.mxu0 0.0
    %363 = vmatprep.subr.mxu0 0.0
    %364 = vmatpush1.xpose.msra.mxu0 %v246
    %365 = vmatprep.subr.mxu0 0.0
    %366 = vmatpush2.xpose.msra.mxu0 0.0
    %367 = vmatprep.subr.mxu0 0.0
    %368 = vmatpush2.xpose.msra.mxu0 0.0
    %369 = vmatprep.subr.mxu0 0.0
    %370 = vmatpush2.xpose.msra.mxu0 0.0
    %371 = vmatprep.subr.mxu0 0.0
    %372 = vmatpush2.xpose.msra.mxu0 0.0
    %373 = vmatprep.subr.mxu0 0.0
    %374 = vmatpush2.xpose.msra.mxu0 0.0
    %375 = vmatprep.subr.mxu0 0.0
    %376 = vmatpush2.xpose.msra.mxu0 0.0
    %377 = vmatprep.subr.mxu0 0.0
    %378 = vmatpush2.xpose.msra.mxu0 0.0
    %379 = vmatprep.subr.mxu0 0.0
    %380 = vmatpush2.xpose.msra.mxu0 0.0
    %381 = vmatprep.subr.mxu0 0.0
    %382 = vmatpush2.xpose.msra.mxu0 0.0
    %383 = vmatprep.subr.mxu0 0.0
    %384 = vmatpush2.xpose.msra.mxu0 0.0
    %385 = vmatprep.subr.mxu0 0.0
    %386 = vmatpush2.xpose.msra.mxu0 0.0
    %387 = vmatprep.subr.mxu0 0.0
    %388 = vmatpush2.xpose.msra.mxu0 0.0
    %389 = vmatprep.subr.mxu0 0.0
    %390 = vmatpush2.xpose.msra.mxu0 0.0
    %391 = vmatprep.subr.mxu0 0.0
    %392 = vmatpush2.xpose.msra.mxu0 0.0
    %393 = vmatprep.subr.mxu0 0.0
    %394 = vmatpush2.xpose.msra.mxu0 0.0
    %395 = vmatprep.subr.mxu0 0.0
    %396 = vmatpush2.xpose.msra.mxu0 0.0
    %397 = vmatprep.mubr.f32.mxu0 0.0
    %398 = vmatmul.mubr.f32.gmra.mxu0 %v169
    %v399 = vpop.f32.mrf.mxu0
    %v400 = vadd.f32 0.0, %v399
    %v401 = vpop.f32.mrf.mxu0
    %402 = vdwg.mxu0
    %vm403 = vcmask 64512
    %v404 = vsel %vm403, %v400, -inf
    %405 = vmax.xlane.f32.xlu0 %v404
    %v406 = vpop.xlane.xlu0 %405
    %v407 = vsub.f32 %v400, %v406
    %v408 = vmul.f32 %v407, 1.442695
    %v409 = vpow.pop %v408
    %v410 = vsel %vm403, %v409, 0.0
    %411 = vadd.xlane.f32.xlu0 %v410
    %v412 = vpop.xlane.xlu0 %411
    %v413 = vrcp.pop %v412
    %v414 = vmul.f32 %v409, %v413
    %415 = vst.msk [vmem:[#allocation4] sm:$0xff] %vm403, %v414
    %v416 = vld [vmem:[%s3] sm:$0xff]
    %v417 = vld [vmem:[%s3 + $0x8] sm:$0xff]
    %v418 = vld [vmem:[%s3 + $0x10] sm:$0xff]
    %v419 = vld [vmem:[%s3 + $0x18] sm:$0xff]
    %v420 = vld [vmem:[%s3 + $0x20] sm:$0xff]
    %v421 = vld [vmem:[%s3 + $0x28] sm:$0xff]
    %v422 = vld [vmem:[%s3 + $0x30] sm:$0xff]
    %v423 = vld [vmem:[%s3 + $0x38] sm:$0xff]
    %v424 = vld [vmem:[%s3 + $0x40] sm:$0xff]
    %v425 = vld [vmem:[%s3 + $0x48] sm:$0xff]
    %v426 = vld [vmem:[%s3 + $0x50] sm:$0xff]
    %v427 = vld [vmem:[%s3 + $0x58] sm:$0xff]
    %v428 = vld [vmem:[%s3 + $0x60] sm:$0xff]
    %v429 = vld [vmem:[%s3 + $0x68] sm:$0xff]
    %v430 = vld [vmem:[%s3 + $0x70] sm:$0xff]
    %v431 = vld [vmem:[%s3 + $0x78] sm:$0xff]
    %432 = vmatprep.subr.mxu0 0.0
    %433 = vmatpush1.msra.mxu0 %v431
    %434 = vmatprep.subr.mxu0 0.0
    %435 = vmatpush1.msra.mxu0 %v430
    %436 = vmatprep.subr.mxu0 0.0
    %437 = vmatpush1.msra.mxu0 %v429
    %438 = vmatprep.subr.mxu0 0.0
    %439 = vmatpush1.msra.mxu0 %v428
    %440 = vmatprep.subr.mxu0 0.0
    %441 = vmatpush1.msra.mxu0 %v427
    %442 = vmatprep.subr.mxu0 0.0
    %443 = vmatpush1.msra.mxu0 %v426
    %444 = vmatprep.subr.mxu0 0.0
    %445 = vmatpush1.msra.mxu0 %v425
    %446 = vmatprep.subr.mxu0 0.0
    %447 = vmatpush1.msra.mxu0 %v424
    %448 = vmatprep.subr.mxu0 0.0
    %449 = vmatpush1.msra.mxu0 %v423
    %450 = vmatprep.subr.mxu0 0.0
    %451 = vmatpush1.msra.mxu0 %v422
    %452 = vmatprep.subr.mxu0 0.0
    %453 = vmatpush1.msra.mxu0 %v421
    %454 = vmatprep.subr.mxu0 0.0
    %455 = vmatpush1.msra.mxu0 %v420
    %456 = vmatprep.subr.mxu0 0.0
    %457 = vmatpush1.msra.mxu0 %v419
    %458 = vmatprep.subr.mxu0 0.0
    %459 = vmatpush1.msra.mxu0 %v418
    %460 = vmatprep.subr.mxu0 0.0
    %461 = vmatpush1.msra.mxu0 %v417
    %462 = vmatprep.subr.mxu0 0.0
    %463 = vmatpush1.msra.mxu0 %v416
    %464 = vmatprep.subr.mxu0 0.0
    %465 = vmatpush2.msra.mxu0 0.0
    %466 = vmatprep.subr.mxu0 0.0
    %467 = vmatpush2.msra.mxu0 0.0
    %468 = vmatprep.subr.mxu0 0.0
    %469 = vmatpush2.msra.mxu0 0.0
    %470 = vmatprep.subr.mxu0 0.0
    %471 = vmatpush2.msra.mxu0 0.0
    %472 = vmatprep.subr.mxu0 0.0
    %473 = vmatpush2.msra.mxu0 0.0
    %474 = vmatprep.subr.mxu0 0.0
    %475 = vmatpush2.msra.mxu0 0.0
    %476 = vmatprep.subr.mxu0 0.0
    %477 = vmatpush2.msra.mxu0 0.0
    %478 = vmatprep.subr.mxu0 0.0
    %479 = vmatpush2.msra.mxu0 0.0
    %480 = vmatprep.subr.mxu0 0.0
    %481 = vmatpush2.msra.mxu0 0.0
    %482 = vmatprep.subr.mxu0 0.0
    %483 = vmatpush2.msra.mxu0 0.0
    %484 = vmatprep.subr.mxu0 0.0
    %485 = vmatpush2.msra.mxu0 0.0
    %486 = vmatprep.subr.mxu0 0.0
    %487 = vmatpush2.msra.mxu0 0.0
    %488 = vmatprep.subr.mxu0 0.0
    %489 = vmatpush2.msra.mxu0 0.0
    %490 = vmatprep.subr.mxu0 0.0
    %491 = vmatpush2.msra.mxu0 0.0
    %492 = vmatprep.subr.mxu0 0.0
    %493 = vmatpush2.msra.mxu0 0.0
    %494 = vmatprep.subr.mxu0 0.0
    %495 = vmatpush2.msra.mxu0 0.0
    %496 = vmatprep.mubr.f32.mxu0 0.0
    %497 = vmatmul.mubr.f32.gmra.mxu0 %v323
    %v498 = vpop.f32.mrf.mxu0
    %v499 = vadd.f32 0.0, %v498
    %v500 = vpop.f32.mrf.mxu0
    %501 = vdwg.mxu0
    %502 = vmatprep.subr.mxu0 0.0
    %503 = vmatpush1.xpose.msra.mxu0 0.0
    %504 = vmatprep.subr.mxu0 0.0
    %505 = vmatpush1.xpose.msra.mxu0 0.0
    %506 = vmatprep.subr.mxu0 0.0
    %507 = vmatpush1.xpose.msra.mxu0 0.0
    %508 = vmatprep.subr.mxu0 0.0
    %509 = vmatpush1.xpose.msra.mxu0 0.0
    %510 = vmatprep.subr.mxu0 0.0
    %511 = vmatpush1.xpose.msra.mxu0 0.0
    %512 = vmatprep.subr.mxu0 0.0
    %513 = vmatpush1.xpose.msra.mxu0 0.0
    %514 = vmatprep.subr.mxu0 0.0
    %515 = vmatpush1.xpose.msra.mxu0 0.0
    %516 = vmatprep.subr.mxu0 0.0
    %517 = vmatpush1.xpose.msra.mxu0 0.0
    %518 = vmatprep.subr.mxu0 0.0
    %519 = vmatpush1.xpose.msra.mxu0 0.0
    %520 = vmatprep.subr.mxu0 0.0
    %521 = vmatpush1.xpose.msra.mxu0 0.0
    %522 = vmatprep.subr.mxu0 0.0
    %523 = vmatpush1.xpose.msra.mxu0 0.0
    %524 = vmatprep.subr.mxu0 0.0
    %525 = vmatpush1.xpose.msra.mxu0 0.0
    %526 = vmatprep.subr.mxu0 0.0
    %527 = vmatpush1.xpose.msra.mxu0 0.0
    %528 = vmatprep.subr.mxu0 0.0
    %529 = vmatpush1.xpose.msra.mxu0 0.0
    %530 = vmatprep.subr.mxu0 0.0
    %531 = vmatpush1.xpose.msra.mxu0 0.0
    %532 = vmatprep.subr.mxu0 0.0
    %533 = vmatpush1.xpose.msra.mxu0 %v248
    %534 = vmatprep.subr.mxu0 0.0
    %535 = vmatpush2.xpose.msra.mxu0 0.0
    %536 = vmatprep.subr.mxu0 0.0
    %537 = vmatpush2.xpose.msra.mxu0 0.0
    %538 = vmatprep.subr.mxu0 0.0
    %539 = vmatpush2.xpose.msra.mxu0 0.0
    %540 = vmatprep.subr.mxu0 0.0
    %541 = vmatpush2.xpose.msra.mxu0 0.0
    %542 = vmatprep.subr.mxu0 0.0
    %543 = vmatpush2.xpose.msra.mxu0 0.0
    %544 = vmatprep.subr.mxu0 0.0
    %545 = vmatpush2.xpose.msra.mxu0 0.0
    %546 = vmatprep.subr.mxu0 0.0
    %547 = vmatpush2.xpose.msra.mxu0 0.0
    %548 = vmatprep.subr.mxu0 0.0
    %549 = vmatpush2.xpose.msra.mxu0 0.0
    %550 = vmatprep.subr.mxu0 0.0
    %551 = vmatpush2.xpose.msra.mxu0 0.0
    %552 = vmatprep.subr.mxu0 0.0
    %553 = vmatpush2.xpose.msra.mxu0 0.0
    %554 = vmatprep.subr.mxu0 0.0
    %555 = vmatpush2.xpose.msra.mxu0 0.0
    %556 = vmatprep.subr.mxu0 0.0
    %557 = vmatpush2.xpose.msra.mxu0 0.0
    %558 = vmatprep.subr.mxu0 0.0
    %559 = vmatpush2.xpose.msra.mxu0 0.0
    %560 = vmatprep.subr.mxu0 0.0
    %561 = vmatpush2.xpose.msra.mxu0 0.0
    %562 = vmatprep.subr.mxu0 0.0
    %563 = vmatpush2.xpose.msra.mxu0 0.0
    %564 = vmatprep.subr.mxu0 0.0
    %565 = vmatpush2.xpose.msra.mxu0 0.0
    %566 = vmatprep.mubr.f32.mxu0 0.0
    %567 = vmatmul.mubr.f32.gmra.mxu0 %v171
    %v568 = vpop.f32.mrf.mxu0
    %v569 = vadd.f32 0.0, %v568
    %v570 = vpop.f32.mrf.mxu0
    %571 = vdwg.mxu0
    %v572 = vsel %vm403, %v569, -inf
    %573 = vmax.xlane.f32.xlu0 %v572
    %v574 = vpop.xlane.xlu0 %573
    %v575 = vsub.f32 %v569, %v574
    %v576 = vmul.f32 %v575, 1.442695
    %v577 = vpow.pop %v576
    %v578 = vsel %vm403, %v577, 0.0
    %579 = vadd.xlane.f32.xlu0 %v578
    %v580 = vpop.xlane.xlu0 %579
    %v581 = vrcp.pop %v580
    %v582 = vmul.f32 %v577, %v581
    %s583 = scalar_lea.vmem [#allocation4], 8
    %584 = vst.msk [vmem:[%s583] sm:$0xff] %vm403, %v582
    %s585 = scalar_lea.vmem %s3, 128
    %v586 = vld [vmem:[%s585] sm:$0xff]
    %v587 = vld [vmem:[%s585 + $0x8] sm:$0xff]
    %v588 = vld [vmem:[%s585 + $0x10] sm:$0xff]
    %v589 = vld [vmem:[%s585 + $0x18] sm:$0xff]
    %v590 = vld [vmem:[%s585 + $0x20] sm:$0xff]
    %v591 = vld [vmem:[%s585 + $0x28] sm:$0xff]
    %v592 = vld [vmem:[%s585 + $0x30] sm:$0xff]
    %v593 = vld [vmem:[%s585 + $0x38] sm:$0xff]
    %v594 = vld [vmem:[%s585 + $0x40] sm:$0xff]
    %v595 = vld [vmem:[%s585 + $0x48] sm:$0xff]
    %v596 = vld [vmem:[%s585 + $0x50] sm:$0xff]
    %v597 = vld [vmem:[%s585 + $0x58] sm:$0xff]
    %v598 = vld [vmem:[%s585 + $0x60] sm:$0xff]
    %v599 = vld [vmem:[%s585 + $0x68] sm:$0xff]
    %v600 = vld [vmem:[%s585 + $0x70] sm:$0xff]
    %v601 = vld [vmem:[%s585 + $0x78] sm:$0xff]
    %602 = vmatprep.subr.mxu0 0.0
    %603 = vmatpush1.msra.mxu0 %v601
    %604 = vmatprep.subr.mxu0 0.0
    %605 = vmatpush1.msra.mxu0 %v600
    %606 = vmatprep.subr.mxu0 0.0
    %607 = vmatpush1.msra.mxu0 %v599
    %608 = vmatprep.subr.mxu0 0.0
    %609 = vmatpush1.msra.mxu0 %v598
    %610 = vmatprep.subr.mxu0 0.0
    %611 = vmatpush1.msra.mxu0 %v597
    %612 = vmatprep.subr.mxu0 0.0
    %613 = vmatpush1.msra.mxu0 %v596
    %614 = vmatprep.subr.mxu0 0.0
    %615 = vmatpush1.msra.mxu0 %v595
    %616 = vmatprep.subr.mxu0 0.0
    %617 = vmatpush1.msra.mxu0 %v594
    %618 = vmatprep.subr.mxu0 0.0
    %619 = vmatpush1.msra.mxu0 %v593
    %620 = vmatprep.subr.mxu0 0.0
    %621 = vmatpush1.msra.mxu0 %v592
    %622 = vmatprep.subr.mxu0 0.0
    %623 = vmatpush1.msra.mxu0 %v591
    %624 = vmatprep.subr.mxu0 0.0
    %625 = vmatpush1.msra.mxu0 %v590
    %626 = vmatprep.subr.mxu0 0.0
    %627 = vmatpush1.msra.mxu0 %v589
    %628 = vmatprep.subr.mxu0 0.0
    %629 = vmatpush1.msra.mxu0 %v588
    %630 = vmatprep.subr.mxu0 0.0
    %631 = vmatpush1.msra.mxu0 %v587
    %632 = vmatprep.subr.mxu0 0.0
    %633 = vmatpush1.msra.mxu0 %v586
    %634 = vmatprep.subr.mxu0 0.0
    %635 = vmatpush2.msra.mxu0 0.0
    %636 = vmatprep.subr.mxu0 0.0
    %637 = vmatpush2.msra.mxu0 0.0
    %638 = vmatprep.subr.mxu0 0.0
    %639 = vmatpush2.msra.mxu0 0.0
    %640 = vmatprep.subr.mxu0 0.0
    %641 = vmatpush2.msra.mxu0 0.0
    %642 = vmatprep.subr.mxu0 0.0
    %643 = vmatpush2.msra.mxu0 0.0
    %644 = vmatprep.subr.mxu0 0.0
    %645 = vmatpush2.msra.mxu0 0.0
    %646 = vmatprep.subr.mxu0 0.0
    %647 = vmatpush2.msra.mxu0 0.0
    %648 = vmatprep.subr.mxu0 0.0
    %649 = vmatpush2.msra.mxu0 0.0
    %650 = vmatprep.subr.mxu0 0.0
    %651 = vmatpush2.msra.mxu0 0.0
    %652 = vmatprep.subr.mxu0 0.0
    %653 = vmatpush2.msra.mxu0 0.0
    %654 = vmatprep.subr.mxu0 0.0
    %655 = vmatpush2.msra.mxu0 0.0
    %656 = vmatprep.subr.mxu0 0.0
    %657 = vmatpush2.msra.mxu0 0.0
    %658 = vmatprep.subr.mxu0 0.0
    %659 = vmatpush2.msra.mxu0 0.0
    %660 = vmatprep.subr.mxu0 0.0
    %661 = vmatpush2.msra.mxu0 0.0
    %662 = vmatprep.subr.mxu0 0.0
    %663 = vmatpush2.msra.mxu0 0.0
    %664 = vmatprep.subr.mxu0 0.0
    %665 = vmatpush2.msra.mxu0 0.0
    %666 = vmatprep.mubr.f32.mxu0 0.0
    %667 = vmatmul.mubr.f32.gmra.mxu0 %v325
    %v668 = vpop.f32.mrf.mxu0
    %v669 = vadd.f32 0.0, %v668
    %v670 = vpop.f32.mrf.mxu0
    %671 = vdwg.mxu0
    %v673 = vsel %vm403, %v582, 0
    %675 = vmatprep.subr.mxu0 0.0
    %676 = vmatpush1.msra.mxu0 0.0
    %677 = vmatprep.subr.mxu0 0.0
    %678 = vmatpush1.msra.mxu0 0.0
    %679 = vmatprep.subr.mxu0 0.0
    %680 = vmatpush1.msra.mxu0 0.0
    %681 = vmatprep.subr.mxu0 0.0
    %682 = vmatpush1.msra.mxu0 0.0
    %683 = vmatprep.subr.mxu0 0.0
    %684 = vmatpush1.msra.mxu0 0.0
    %685 = vmatprep.subr.mxu0 0.0
    %686 = vmatpush1.msra.mxu0 0.0
    %687 = vmatprep.subr.mxu0 0.0
    %688 = vmatpush1.msra.mxu0 0.0
    %689 = vmatprep.subr.mxu0 0.0
    %690 = vmatpush1.msra.mxu0 0.0
    %691 = vmatprep.subr.mxu0 0.0
    %692 = vmatpush1.msra.mxu0 0.0
    %693 = vmatprep.subr.mxu0 0.0
    %694 = vmatpush1.msra.mxu0 0.0
    %695 = vmatprep.subr.mxu0 0.0
    %696 = vmatpush1.msra.mxu0 0.0
    %697 = vmatprep.subr.mxu0 0.0
    %698 = vmatpush1.msra.mxu0 0.0
    %699 = vmatprep.subr.mxu0 0.0
    %700 = vmatpush1.msra.mxu0 0.0
    %701 = vmatprep.subr.mxu0 0.0
    %702 = vmatpush1.msra.mxu0 0.0
    %703 = vmatprep.subr.mxu0 0.0
    %704 = vmatpush1.msra.mxu0 0.0
    %705 = vmatprep.subr.mxu0 0.0
    %706 = vmatpush1.msra.mxu0 %v669
    %707 = vmatprep.subr.mxu0 0.0
    %708 = vmatpush2.msra.mxu0 0.0
    %709 = vmatprep.subr.mxu0 0.0
    %710 = vmatpush2.msra.mxu0 0.0
    %711 = vmatprep.subr.mxu0 0.0
    %712 = vmatpush2.msra.mxu0 0.0
    %713 = vmatprep.subr.mxu0 0.0
    %714 = vmatpush2.msra.mxu0 0.0
    %715 = vmatprep.subr.mxu0 0.0
    %716 = vmatpush2.msra.mxu0 0.0
    %717 = vmatprep.subr.mxu0 0.0
    %718 = vmatpush2.msra.mxu0 0.0
    %719 = vmatprep.subr.mxu0 0.0
    %720 = vmatpush2.msra.mxu0 0.0
    %721 = vmatprep.subr.mxu0 0.0
    %722 = vmatpush2.msra.mxu0 0.0
    %723 = vmatprep.subr.mxu0 0.0
    %724 = vmatpush2.msra.mxu0 0.0
    %725 = vmatprep.subr.mxu0 0.0
    %726 = vmatpush2.msra.mxu0 0.0
    %727 = vmatprep.subr.mxu0 0.0
    %728 = vmatpush2.msra.mxu0 0.0
    %729 = vmatprep.subr.mxu0 0.0
    %730 = vmatpush2.msra.mxu0 0.0
    %731 = vmatprep.subr.mxu0 0.0
    %732 = vmatpush2.msra.mxu0 0.0
    %733 = vmatprep.subr.mxu0 0.0
    %734 = vmatpush2.msra.mxu0 0.0
    %735 = vmatprep.subr.mxu0 0.0
    %736 = vmatpush2.msra.mxu0 0.0
    %737 = vmatprep.subr.mxu0 0.0
    %738 = vmatpush2.msra.mxu0 0.0
    %739 = vmatprep.mubr.f32.mxu0 0.0
    %740 = vmatmul.mubr.f32.gmra.mxu0 %v673
    %v741 = vpop.f32.mrf.mxu0
    %v742 = vadd.f32 0.0, %v741
    %v743 = vpop.f32.mrf.mxu0
    %744 = vdwg.mxu0
    %v746 = vsel %vm403, %v414, 0
    %748 = vmatprep.subr.mxu0 0.0
    %749 = vmatpush1.msra.mxu0 0.0
    %750 = vmatprep.subr.mxu0 0.0
    %751 = vmatpush1.msra.mxu0 0.0
    %752 = vmatprep.subr.mxu0 0.0
    %753 = vmatpush1.msra.mxu0 0.0
    %754 = vmatprep.subr.mxu0 0.0
    %755 = vmatpush1.msra.mxu0 0.0
    %756 = vmatprep.subr.mxu0 0.0
    %757 = vmatpush1.msra.mxu0 0.0
    %758 = vmatprep.subr.mxu0 0.0
    %759 = vmatpush1.msra.mxu0 0.0
    %760 = vmatprep.subr.mxu0 0.0
    %761 = vmatpush1.msra.mxu0 0.0
    %762 = vmatprep.subr.mxu0 0.0
    %763 = vmatpush1.msra.mxu0 0.0
    %764 = vmatprep.subr.mxu0 0.0
    %765 = vmatpush1.msra.mxu0 0.0
    %766 = vmatprep.subr.mxu0 0.0
    %767 = vmatpush1.msra.mxu0 0.0
    %768 = vmatprep.subr.mxu0 0.0
    %769 = vmatpush1.msra.mxu0 0.0
    %770 = vmatprep.subr.mxu0 0.0
    %771 = vmatpush1.msra.mxu0 0.0
    %772 = vmatprep.subr.mxu0 0.0
    %773 = vmatpush1.msra.mxu0 0.0
    %774 = vmatprep.subr.mxu0 0.0
    %775 = vmatpush1.msra.mxu0 0.0
    %776 = vmatprep.subr.mxu0 0.0
    %777 = vmatpush1.msra.mxu0 0.0
    %778 = vmatprep.subr.mxu0 0.0
    %779 = vmatpush1.msra.mxu0 %v499
    %780 = vmatprep.subr.mxu0 0.0
    %781 = vmatpush2.msra.mxu0 0.0
    %782 = vmatprep.subr.mxu0 0.0
    %783 = vmatpush2.msra.mxu0 0.0
    %784 = vmatprep.subr.mxu0 0.0
    %785 = vmatpush2.msra.mxu0 0.0
    %786 = vmatprep.subr.mxu0 0.0
    %787 = vmatpush2.msra.mxu0 0.0
    %788 = vmatprep.subr.mxu0 0.0
    %789 = vmatpush2.msra.mxu0 0.0
    %790 = vmatprep.subr.mxu0 0.0
    %791 = vmatpush2.msra.mxu0 0.0
    %792 = vmatprep.subr.mxu0 0.0
    %793 = vmatpush2.msra.mxu0 0.0
    %794 = vmatprep.subr.mxu0 0.0
    %795 = vmatpush2.msra.mxu0 0.0
    %796 = vmatprep.subr.mxu0 0.0
    %797 = vmatpush2.msra.mxu0 0.0
    %798 = vmatprep.subr.mxu0 0.0
    %799 = vmatpush2.msra.mxu0 0.0
    %800 = vmatprep.subr.mxu0 0.0
    %801 = vmatpush2.msra.mxu0 0.0
    %802 = vmatprep.subr.mxu0 0.0
    %803 = vmatpush2.msra.mxu0 0.0
    %804 = vmatprep.subr.mxu0 0.0
    %805 = vmatpush2.msra.mxu0 0.0
    %806 = vmatprep.subr.mxu0 0.0
    %807 = vmatpush2.msra.mxu0 0.0
    %808 = vmatprep.subr.mxu0 0.0
    %809 = vmatpush2.msra.mxu0 0.0
    %810 = vmatprep.subr.mxu0 0.0
    %811 = vmatpush2.msra.mxu0 0.0
    %812 = vmatprep.mubr.f32.mxu0 0.0
    %813 = vmatmul.mubr.f32.gmra.mxu0 %v746
    %v814 = vpop.f32.mrf.mxu0
    %v815 = vadd.f32 %v742, %v814
    %v816 = vpop.f32.mrf.mxu0
    %817 = vdwg.mxu0
    %v818 = vadd.f32 %v30, %v815
    %v819 = vld [vmem:[%s4] sm:$0x1]
    %v821 = vlaneseq
    %v822 = vshrl.u32 %v821, 7
    %v823 = vsub.s32 0, %v822
    %v824 = vrot.slane %v819, %v823
    %v826 = vadd.f32 %v818, %v824
    %v827 = vsel %vm76, %v826, 0.0
    %828 = vadd.xlane.f32.xlu0 %v827
    %v829 = vpop.xlane.xlu0 %828
    %v830 = vrcp.pop 10.0
    %v831 = vmul.f32 %v829, %v830
    %v832 = vsub.f32 %v826, %v831
    %v833 = vmul.f32 %v832, %v832
    %v834 = vsel %vm76, %v833, 0.0
    %835 = vadd.xlane.f32.xlu0 %v834
    %v836 = vpop.xlane.xlu0 %835
    %v837 = vmul.f32 %v836, %v830
    %v838 = vadd.f32 %v837, 1e-06
    %v839 = vrsqrt.pop %v838
    %v840 = vmul.f32 %v832, %v839
    %v841 = vld [vmem:[%s5] sm:$0x1]
    %v843 = vlaneseq
    %v844 = vshrl.u32 %v843, 7
    %v845 = vsub.s32 0, %v844
    %v846 = vrot.slane %v841, %v845
    %v848 = vmul.f32 %v840, %v846
    %v849 = vld [vmem:[%s6] sm:$0x1]
    %v851 = vlaneseq
    %v852 = vshrl.u32 %v851, 7
    %v853 = vsub.s32 0, %v852
    %v854 = vrot.slane %v849, %v853
    %v856 = vadd.f32 %v848, %v854
    %857 = vst.msk [vmem:[#allocation2] sm:$0xff] %vm76, %v856
    %858 = vmatprep.subr.mxu0 0.0
    %859 = vmatpush1.xpose.msra.mxu0 0.0
    %860 = vmatprep.subr.mxu0 0.0
    %861 = vmatpush1.xpose.msra.mxu0 0.0
    %862 = vmatprep.subr.mxu0 0.0
    %863 = vmatpush1.xpose.msra.mxu0 0.0
    %864 = vmatprep.subr.mxu0 0.0
    %865 = vmatpush1.xpose.msra.mxu0 0.0
    %866 = vmatprep.subr.mxu0 0.0
    %867 = vmatpush1.xpose.msra.mxu0 0.0
    %868 = vmatprep.subr.mxu0 0.0
    %869 = vmatpush1.xpose.msra.mxu0 0.0
    %870 = vmatprep.subr.mxu0 0.0
    %871 = vmatpush1.xpose.msra.mxu0 0.0
    %872 = vmatprep.subr.mxu0 0.0
    %873 = vmatpush1.xpose.msra.mxu0 0.0
    %874 = vmatprep.subr.mxu0 0.0
    %875 = vmatpush1.xpose.msra.mxu0 0.0
    %876 = vmatprep.subr.mxu0 0.0
    %877 = vmatpush1.xpose.msra.mxu0 0.0
    %878 = vmatprep.subr.mxu0 0.0
    %879 = vmatpush1.xpose.msra.mxu0 0.0
    %880 = vmatprep.subr.mxu0 0.0
    %881 = vmatpush1.xpose.msra.mxu0 0.0
    %882 = vmatprep.subr.mxu0 0.0
    %883 = vmatpush1.xpose.msra.mxu0 0.0
    %884 = vmatprep.subr.mxu0 0.0
    %885 = vmatpush1.xpose.msra.mxu0 0.0
    %886 = vmatprep.subr.mxu0 0.0
    %887 = vmatpush1.xpose.msra.mxu0 0.0
    %888 = vmatprep.subr.mxu0 0.0
    %889 = vmatpush1.xpose.msra.mxu0 %v252
    %890 = vmatprep.subr.mxu0 0.0
    %891 = vmatpush2.xpose.msra.mxu0 0.0
    %892 = vmatprep.subr.mxu0 0.0
    %893 = vmatpush2.xpose.msra.mxu0 0.0
    %894 = vmatprep.subr.mxu0 0.0
    %895 = vmatpush2.xpose.msra.mxu0 0.0
    %896 = vmatprep.subr.mxu0 0.0
    %897 = vmatpush2.xpose.msra.mxu0 0.0
    %898 = vmatprep.subr.mxu0 0.0
    %899 = vmatpush2.xpose.msra.mxu0 0.0
    %900 = vmatprep.subr.mxu0 0.0
    %901 = vmatpush2.xpose.msra.mxu0 0.0
    %902 = vmatprep.subr.mxu0 0.0
    %903 = vmatpush2.xpose.msra.mxu0 0.0
    %904 = vmatprep.subr.mxu0 0.0
    %905 = vmatpush2.xpose.msra.mxu0 0.0
    %906 = vmatprep.subr.mxu0 0.0
    %907 = vmatpush2.xpose.msra.mxu0 0.0
    %908 = vmatprep.subr.mxu0 0.0
    %909 = vmatpush2.xpose.msra.mxu0 0.0
    %910 = vmatprep.subr.mxu0 0.0
    %911 = vmatpush2.xpose.msra.mxu0 0.0
    %912 = vmatprep.subr.mxu0 0.0
    %913 = vmatpush2.xpose.msra.mxu0 0.0
    %914 = vmatprep.subr.mxu0 0.0
    %915 = vmatpush2.xpose.msra.mxu0 0.0
    %916 = vmatprep.subr.mxu0 0.0
    %917 = vmatpush2.xpose.msra.mxu0 0.0
    %918 = vmatprep.subr.mxu0 0.0
    %919 = vmatpush2.xpose.msra.mxu0 0.0
    %920 = vmatprep.subr.mxu0 0.0
    %921 = vmatpush2.xpose.msra.mxu0 0.0
    %922 = vmatprep.mubr.f32.mxu0 0.0
    %923 = vmatmul.mubr.f32.gmra.mxu0 %v175
    %v924 = vpop.f32.mrf.mxu0
    %v925 = vadd.f32 0.0, %v924
    %v926 = vpop.f32.mrf.mxu0
    %927 = vdwg.mxu0
    %v928 = vsel %vm403, %v925, -inf
    %929 = vmax.xlane.f32.xlu0 %v928
    %v930 = vpop.xlane.xlu0 %929
    %v931 = vsub.f32 %v925, %v930
    %v932 = vmul.f32 %v931, 1.442695
    %v933 = vpow.pop %v932
    %v934 = vsel %vm403, %v933, 0.0
    %935 = vadd.xlane.f32.xlu0 %v934
    %v936 = vpop.xlane.xlu0 %935
    %v937 = vrcp.pop %v936
    %v938 = vmul.f32 %v933, %v937
    %s939 = scalar_lea.vmem [#allocation4], 16
    %940 = vst.msk [vmem:[%s939] sm:$0xff] %vm403, %v938
    %v941 = vld [vmem:[%s3] sm:$0xff]
    %v942 = vld [vmem:[%s3 + $0x8] sm:$0xff]
    %v943 = vld [vmem:[%s3 + $0x10] sm:$0xff]
    %v944 = vld [vmem:[%s3 + $0x18] sm:$0xff]
    %v945 = vld [vmem:[%s3 + $0x20] sm:$0xff]
    %v946 = vld [vmem:[%s3 + $0x28] sm:$0xff]
    %v947 = vld [vmem:[%s3 + $0x30] sm:$0xff]
    %v948 = vld [vmem:[%s3 + $0x38] sm:$0xff]
    %v949 = vld [vmem:[%s3 + $0x40] sm:$0xff]
    %v950 = vld [vmem:[%s3 + $0x48] sm:$0xff]
    %v951 = vld [vmem:[%s3 + $0x50] sm:$0xff]
    %v952 = vld [vmem:[%s3 + $0x58] sm:$0xff]
    %v953 = vld [vmem:[%s3 + $0x60] sm:$0xff]
    %v954 = vld [vmem:[%s3 + $0x68] sm:$0xff]
    %v955 = vld [vmem:[%s3 + $0x70] sm:$0xff]
    %v956 = vld [vmem:[%s3 + $0x78] sm:$0xff]
    %957 = vmatprep.subr.mxu0 0.0
    %958 = vmatpush1.msra.mxu0 %v956
    %959 = vmatprep.subr.mxu0 0.0
    %960 = vmatpush1.msra.mxu0 %v955
    %961 = vmatprep.subr.mxu0 0.0
    %962 = vmatpush1.msra.mxu0 %v954
    %963 = vmatprep.subr.mxu0 0.0
    %964 = vmatpush1.msra.mxu0 %v953
    %965 = vmatprep.subr.mxu0 0.0
    %966 = vmatpush1.msra.mxu0 %v952
    %967 = vmatprep.subr.mxu0 0.0
    %968 = vmatpush1.msra.mxu0 %v951
    %969 = vmatprep.subr.mxu0 0.0
    %970 = vmatpush1.msra.mxu0 %v950
    %971 = vmatprep.subr.mxu0 0.0
    %972 = vmatpush1.msra.mxu0 %v949
    %973 = vmatprep.subr.mxu0 0.0
    %974 = vmatpush1.msra.mxu0 %v948
    %975 = vmatprep.subr.mxu0 0.0
    %976 = vmatpush1.msra.mxu0 %v947
    %977 = vmatprep.subr.mxu0 0.0
    %978 = vmatpush1.msra.mxu0 %v946
    %979 = vmatprep.subr.mxu0 0.0
    %980 = vmatpush1.msra.mxu0 %v945
    %981 = vmatprep.subr.mxu0 0.0
    %982 = vmatpush1.msra.mxu0 %v944
    %983 = vmatprep.subr.mxu0 0.0
    %984 = vmatpush1.msra.mxu0 %v943
    %985 = vmatprep.subr.mxu0 0.0
    %986 = vmatpush1.msra.mxu0 %v942
    %987 = vmatprep.subr.mxu0 0.0
    %988 = vmatpush1.msra.mxu0 %v941
    %989 = vmatprep.subr.mxu0 0.0
    %990 = vmatpush2.msra.mxu0 0.0
    %991 = vmatprep.subr.mxu0 0.0
    %992 = vmatpush2.msra.mxu0 0.0
    %993 = vmatprep.subr.mxu0 0.0
    %994 = vmatpush2.msra.mxu0 0.0
    %995 = vmatprep.subr.mxu0 0.0
    %996 = vmatpush2.msra.mxu0 0.0
    %997 = vmatprep.subr.mxu0 0.0
    %998 = vmatpush2.msra.mxu0 0.0
    %999 = vmatprep.subr.mxu0 0.0
    %1000 = vmatpush2.msra.mxu0 0.0
    %1001 = vmatprep.subr.mxu0 0.0
    %1002 = vmatpush2.msra.mxu0 0.0
    %1003 = vmatprep.subr.mxu0 0.0
    %1004 = vmatpush2.msra.mxu0 0.0
    %1005 = vmatprep.subr.mxu0 0.0
    %1006 = vmatpush2.msra.mxu0 0.0
    %1007 = vmatprep.subr.mxu0 0.0
    %1008 = vmatpush2.msra.mxu0 0.0
    %1009 = vmatprep.subr.mxu0 0.0
    %1010 = vmatpush2.msra.mxu0 0.0
    %1011 = vmatprep.subr.mxu0 0.0
    %1012 = vmatpush2.msra.mxu0 0.0
    %1013 = vmatprep.subr.mxu0 0.0
    %1014 = vmatpush2.msra.mxu0 0.0
    %1015 = vmatprep.subr.mxu0 0.0
    %1016 = vmatpush2.msra.mxu0 0.0
    %1017 = vmatprep.subr.mxu0 0.0
    %1018 = vmatpush2.msra.mxu0 0.0
    %1019 = vmatprep.subr.mxu0 0.0
    %1020 = vmatpush2.msra.mxu0 0.0
    %1021 = vmatprep.mubr.f32.mxu0 0.0
    %1022 = vmatmul.mubr.f32.gmra.mxu0 %v329
    %v1023 = vpop.f32.mrf.mxu0
    %v1024 = vadd.f32 0.0, %v1023
    %v1025 = vpop.f32.mrf.mxu0
    %1026 = vdwg.mxu0
    %1027 = vmatprep.subr.mxu0 0.0
    %1028 = vmatpush1.xpose.msra.mxu0 0.0
    %1029 = vmatprep.subr.mxu0 0.0
    %1030 = vmatpush1.xpose.msra.mxu0 0.0
    %1031 = vmatprep.subr.mxu0 0.0
    %1032 = vmatpush1.xpose.msra.mxu0 0.0
    %1033 = vmatprep.subr.mxu0 0.0
    %1034 = vmatpush1.xpose.msra.mxu0 0.0
    %1035 = vmatprep.subr.mxu0 0.0
    %1036 = vmatpush1.xpose.msra.mxu0 0.0
    %1037 = vmatprep.subr.mxu0 0.0
    %1038 = vmatpush1.xpose.msra.mxu0 0.0
    %1039 = vmatprep.subr.mxu0 0.0
    %1040 = vmatpush1.xpose.msra.mxu0 0.0
    %1041 = vmatprep.subr.mxu0 0.0
    %1042 = vmatpush1.xpose.msra.mxu0 0.0
    %1043 = vmatprep.subr.mxu0 0.0
    %1044 = vmatpush1.xpose.msra.mxu0 0.0
    %1045 = vmatprep.subr.mxu0 0.0
    %1046 = vmatpush1.xpose.msra.mxu0 0.0
    %1047 = vmatprep.subr.mxu0 0.0
    %1048 = vmatpush1.xpose.msra.mxu0 0.0
    %1049 = vmatprep.subr.mxu0 0.0
    %1050 = vmatpush1.xpose.msra.mxu0 0.0
    %1051 = vmatprep.subr.mxu0 0.0
    %1052 = vmatpush1.xpose.msra.mxu0 0.0
    %1053 = vmatprep.subr.mxu0 0.0
    %1054 = vmatpush1.xpose.msra.mxu0 0.0
    %1055 = vmatprep.subr.mxu0 0.0
    %1056 = vmatpush1.xpose.msra.mxu0 0.0
    %1057 = vmatprep.subr.mxu0 0.0
    %1058 = vmatpush1.xpose.msra.mxu0 %v254
    %1059 = vmatprep.subr.mxu0 0.0
    %1060 = vmatpush2.xpose.msra.mxu0 0.0
    %1061 = vmatprep.subr.mxu0 0.0
    %1062 = vmatpush2.xpose.msra.mxu0 0.0
    %1063 = vmatprep.subr.mxu0 0.0
    %1064 = vmatpush2.xpose.msra.mxu0 0.0
    %1065 = vmatprep.subr.mxu0 0.0
    %1066 = vmatpush2.xpose.msra.mxu0 0.0
    %1067 = vmatprep.subr.mxu0 0.0
    %1068 = vmatpush2.xpose.msra.mxu0 0.0
    %1069 = vmatprep.subr.mxu0 0.0
    %1070 = vmatpush2.xpose.msra.mxu0 0.0
    %1071 = vmatprep.subr.mxu0 0.0
    %1072 = vmatpush2.xpose.msra.mxu0 0.0
    %1073 = vmatprep.subr.mxu0 0.0
    %1074 = vmatpush2.xpose.msra.mxu0 0.0
    %1075 = vmatprep.subr.mxu0 0.0
    %1076 = vmatpush2.xpose.msra.mxu0 0.0
    %1077 = vmatprep.subr.mxu0 0.0
    %1078 = vmatpush2.xpose.msra.mxu0 0.0
    %1079 = vmatprep.subr.mxu0 0.0
    %1080 = vmatpush2.xpose.msra.mxu0 0.0
    %1081 = vmatprep.subr.mxu0 0.0
    %1082 = vmatpush2.xpose.msra.mxu0 0.0
    %1083 = vmatprep.subr.mxu0 0.0
    %1084 = vmatpush2.xpose.msra.mxu0 0.0
    %1085 = vmatprep.subr.mxu0 0.0
    %1086 = vmatpush2.xpose.msra.mxu0 0.0
    %1087 = vmatprep.subr.mxu0 0.0
    %1088 = vmatpush2.xpose.msra.mxu0 0.0
    %1089 = vmatprep.subr.mxu0 0.0
    %1090 = vmatpush2.xpose.msra.mxu0 0.0
    %1091 = vmatprep.mubr.f32.mxu0 0.0
    %1092 = vmatmul.mubr.f32.gmra.mxu0 %v177
    %v1093 = vpop.f32.mrf.mxu0
    %v1094 = vadd.f32 0.0, %v1093
    %v1095 = vpop.f32.mrf.mxu0
    %1096 = vdwg.mxu0
    %v1097 = vsel %vm403, %v1094, -inf
    %1098 = vmax.xlane.f32.xlu0 %v1097
    %v1099 = vpop.xlane.xlu0 %1098
    %v1100 = vsub.f32 %v1094, %v1099
    %v1101 = vmul.f32 %v1100, 1.442695
    %v1102 = vpow.pop %v1101
    %v1103 = vsel %vm403, %v1102, 0.0
    %1104 = vadd.xlane.f32.xlu0 %v1103
    %v1105 = vpop.xlane.xlu0 %1104
    %v1106 = vrcp.pop %v1105
    %v1107 = vmul.f32 %v1102, %v1106
    %s1108 = scalar_lea.vmem [#allocation4], 24
    %1109 = vst.msk [vmem:[%s1108] sm:$0xff] %vm403, %v1107
    %v1110 = vld [vmem:[%s585] sm:$0xff]
    %v1111 = vld [vmem:[%s585 + $0x8] sm:$0xff]
    %v1112 = vld [vmem:[%s585 + $0x10] sm:$0xff]
    %v1113 = vld [vmem:[%s585 + $0x18] sm:$0xff]
    %v1114 = vld [vmem:[%s585 + $0x20] sm:$0xff]
    %v1115 = vld [vmem:[%s585 + $0x28] sm:$0xff]
    %v1116 = vld [vmem:[%s585 + $0x30] sm:$0xff]
    %v1117 = vld [vmem:[%s585 + $0x38] sm:$0xff]
    %v1118 = vld [vmem:[%s585 + $0x40] sm:$0xff]
    %v1119 = vld [vmem:[%s585 + $0x48] sm:$0xff]
    %v1120 = vld [vmem:[%s585 + $0x50] sm:$0xff]
    %v1121 = vld [vmem:[%s585 + $0x58] sm:$0xff]
    %v1122 = vld [vmem:[%s585 + $0x60] sm:$0xff]
    %v1123 = vld [vmem:[%s585 + $0x68] sm:$0xff]
    %v1124 = vld [vmem:[%s585 + $0x70] sm:$0xff]
    %v1125 = vld [vmem:[%s585 + $0x78] sm:$0xff]
    %1126 = vmatprep.subr.mxu0 0.0
    %1127 = vmatpush1.msra.mxu0 %v1125
    %1128 = vmatprep.subr.mxu0 0.0
    %1129 = vmatpush1.msra.mxu0 %v1124
    %1130 = vmatprep.subr.mxu0 0.0
    %1131 = vmatpush1.msra.mxu0 %v1123
    %1132 = vmatprep.subr.mxu0 0.0
    %1133 = vmatpush1.msra.mxu0 %v1122
    %1134 = vmatprep.subr.mxu0 0.0
    %1135 = vmatpush1.msra.mxu0 %v1121
    %1136 = vmatprep.subr.mxu0 0.0
    %1137 = vmatpush1.msra.mxu0 %v1120
    %1138 = vmatprep.subr.mxu0 0.0
    %1139 = vmatpush1.msra.mxu0 %v1119
    %1140 = vmatprep.subr.mxu0 0.0
    %1141 = vmatpush1.msra.mxu0 %v1118
    %1142 = vmatprep.subr.mxu0 0.0
    %1143 = vmatpush1.msra.mxu0 %v1117
    %1144 = vmatprep.subr.mxu0 0.0
    %1145 = vmatpush1.msra.mxu0 %v1116
    %1146 = vmatprep.subr.mxu0 0.0
    %1147 = vmatpush1.msra.mxu0 %v1115
    %1148 = vmatprep.subr.mxu0 0.0
    %1149 = vmatpush1.msra.mxu0 %v1114
    %1150 = vmatprep.subr.mxu0 0.0
    %1151 = vmatpush1.msra.mxu0 %v1113
    %1152 = vmatprep.subr.mxu0 0.0
    %1153 = vmatpush1.msra.mxu0 %v1112
    %1154 = vmatprep.subr.mxu0 0.0
    %1155 = vmatpush1.msra.mxu0 %v1111
    %1156 = vmatprep.subr.mxu0 0.0
    %1157 = vmatpush1.msra.mxu0 %v1110
    %1158 = vmatprep.subr.mxu0 0.0
    %1159 = vmatpush2.msra.mxu0 0.0
    %1160 = vmatprep.subr.mxu0 0.0
    %1161 = vmatpush2.msra.mxu0 0.0
    %1162 = vmatprep.subr.mxu0 0.0
    %1163 = vmatpush2.msra.mxu0 0.0
    %1164 = vmatprep.subr.mxu0 0.0
    %1165 = vmatpush2.msra.mxu0 0.0
    %1166 = vmatprep.subr.mxu0 0.0
    %1167 = vmatpush2.msra.mxu0 0.0
    %1168 = vmatprep.subr.mxu0 0.0
    %1169 = vmatpush2.msra.mxu0 0.0
    %1170 = vmatprep.subr.mxu0 0.0
    %1171 = vmatpush2.msra.mxu0 0.0
    %1172 = vmatprep.subr.mxu0 0.0
    %1173 = vmatpush2.msra.mxu0 0.0
    %1174 = vmatprep.subr.mxu0 0.0
    %1175 = vmatpush2.msra.mxu0 0.0
    %1176 = vmatprep.subr.mxu0 0.0
    %1177 = vmatpush2.msra.mxu0 0.0
    %1178 = vmatprep.subr.mxu0 0.0
    %1179 = vmatpush2.msra.mxu0 0.0
    %1180 = vmatprep.subr.mxu0 0.0
    %1181 = vmatpush2.msra.mxu0 0.0
    %1182 = vmatprep.subr.mxu0 0.0
    %1183 = vmatpush2.msra.mxu0 0.0
    %1184 = vmatprep.subr.mxu0 0.0
    %1185 = vmatpush2.msra.mxu0 0.0
    %1186 = vmatprep.subr.mxu0 0.0
    %1187 = vmatpush2.msra.mxu0 0.0
    %1188 = vmatprep.subr.mxu0 0.0
    %1189 = vmatpush2.msra.mxu0 0.0
    %1190 = vmatprep.mubr.f32.mxu0 0.0
    %1191 = vmatmul.mubr.f32.gmra.mxu0 %v331
    %v1192 = vpop.f32.mrf.mxu0
    %v1193 = vadd.f32 0.0, %v1192
    %v1194 = vpop.f32.mrf.mxu0
    %1195 = vdwg.mxu0
    %v1197 = vsel %vm403, %v1107, 0
    %1199 = vmatprep.subr.mxu0 0.0
    %1200 = vmatpush1.msra.mxu0 0.0
    %1201 = vmatprep.subr.mxu0 0.0
    %1202 = vmatpush1.msra.mxu0 0.0
    %1203 = vmatprep.subr.mxu0 0.0
    %1204 = vmatpush1.msra.mxu0 0.0
    %1205 = vmatprep.subr.mxu0 0.0
    %1206 = vmatpush1.msra.mxu0 0.0
    %1207 = vmatprep.subr.mxu0 0.0
    %1208 = vmatpush1.msra.mxu0 0.0
    %1209 = vmatprep.subr.mxu0 0.0
    %1210 = vmatpush1.msra.mxu0 0.0
    %1211 = vmatprep.subr.mxu0 0.0
    %1212 = vmatpush1.msra.mxu0 0.0
    %1213 = vmatprep.subr.mxu0 0.0
    %1214 = vmatpush1.msra.mxu0 0.0
    %1215 = vmatprep.subr.mxu0 0.0
    %1216 = vmatpush1.msra.mxu0 0.0
    %1217 = vmatprep.subr.mxu0 0.0
    %1218 = vmatpush1.msra.mxu0 0.0
    %1219 = vmatprep.subr.mxu0 0.0
    %1220 = vmatpush1.msra.mxu0 0.0
    %1221 = vmatprep.subr.mxu0 0.0
    %1222 = vmatpush1.msra.mxu0 0.0
    %1223 = vmatprep.subr.mxu0 0.0
    %1224 = vmatpush1.msra.mxu0 0.0
    %1225 = vmatprep.subr.mxu0 0.0
    %1226 = vmatpush1.msra.mxu0 0.0
    %1227 = vmatprep.subr.mxu0 0.0
    %1228 = vmatpush1.msra.mxu0 0.0
    %1229 = vmatprep.subr.mxu0 0.0
    %1230 = vmatpush1.msra.mxu0 %v1193
    %1231 = vmatprep.subr.mxu0 0.0
    %1232 = vmatpush2.msra.mxu0 0.0
    %1233 = vmatprep.subr.mxu0 0.0
    %1234 = vmatpush2.msra.mxu0 0.0
    %1235 = vmatprep.subr.mxu0 0.0
    %1236 = vmatpush2.msra.mxu0 0.0
    %1237 = vmatprep.subr.mxu0 0.0
    %1238 = vmatpush2.msra.mxu0 0.0
    %1239 = vmatprep.subr.mxu0 0.0
    %1240 = vmatpush2.msra.mxu0 0.0
    %1241 = vmatprep.subr.mxu0 0.0
    %1242 = vmatpush2.msra.mxu0 0.0
    %1243 = vmatprep.subr.mxu0 0.0
    %1244 = vmatpush2.msra.mxu0 0.0
    %1245 = vmatprep.subr.mxu0 0.0
    %1246 = vmatpush2.msra.mxu0 0.0
    %1247 = vmatprep.subr.mxu0 0.0
    %1248 = vmatpush2.msra.mxu0 0.0
    %1249 = vmatprep.subr.mxu0 0.0
    %1250 = vmatpush2.msra.mxu0 0.0
    %1251 = vmatprep.subr.mxu0 0.0
    %1252 = vmatpush2.msra.mxu0 0.0
    %1253 = vmatprep.subr.mxu0 0.0
    %1254 = vmatpush2.msra.mxu0 0.0
    %1255 = vmatprep.subr.mxu0 0.0
    %1256 = vmatpush2.msra.mxu0 0.0
    %1257 = vmatprep.subr.mxu0 0.0
    %1258 = vmatpush2.msra.mxu0 0.0
    %1259 = vmatprep.subr.mxu0 0.0
    %1260 = vmatpush2.msra.mxu0 0.0
    %1261 = vmatprep.subr.mxu0 0.0
    %1262 = vmatpush2.msra.mxu0 0.0
    %1263 = vmatprep.mubr.f32.mxu0 0.0
    %1264 = vmatmul.mubr.f32.gmra.mxu0 %v1197
    %v1265 = vpop.f32.mrf.mxu0
    %v1266 = vadd.f32 0.0, %v1265
    %v1267 = vpop.f32.mrf.mxu0
    %1268 = vdwg.mxu0
    %v1270 = vsel %vm403, %v938, 0
    %1272 = vmatprep.subr.mxu0 0.0
    %1273 = vmatpush1.msra.mxu0 0.0
    %1274 = vmatprep.subr.mxu0 0.0
    %1275 = vmatpush1.msra.mxu0 0.0
    %1276 = vmatprep.subr.mxu0 0.0
    %1277 = vmatpush1.msra.mxu0 0.0
    %1278 = vmatprep.subr.mxu0 0.0
    %1279 = vmatpush1.msra.mxu0 0.0
    %1280 = vmatprep.subr.mxu0 0.0
    %1281 = vmatpush1.msra.mxu0 0.0
    %1282 = vmatprep.subr.mxu0 0.0
    %1283 = vmatpush1.msra.mxu0 0.0
    %1284 = vmatprep.subr.mxu0 0.0
    %1285 = vmatpush1.msra.mxu0 0.0
    %1286 = vmatprep.subr.mxu0 0.0
    %1287 = vmatpush1.msra.mxu0 0.0
    %1288 = vmatprep.subr.mxu0 0.0
    %1289 = vmatpush1.msra.mxu0 0.0
    %1290 = vmatprep.subr.mxu0 0.0
    %1291 = vmatpush1.msra.mxu0 0.0
    %1292 = vmatprep.subr.mxu0 0.0
    %1293 = vmatpush1.msra.mxu0 0.0
    %1294 = vmatprep.subr.mxu0 0.0
    %1295 = vmatpush1.msra.mxu0 0.0
    %1296 = vmatprep.subr.mxu0 0.0
    %1297 = vmatpush1.msra.mxu0 0.0
    %1298 = vmatprep.subr.mxu0 0.0
    %1299 = vmatpush1.msra.mxu0 0.0
    %1300 = vmatprep.subr.mxu0 0.0
    %1301 = vmatpush1.msra.mxu0 0.0
    %1302 = vmatprep.subr.mxu0 0.0
    %1303 = vmatpush1.msra.mxu0 %v1024
    %1304 = vmatprep.subr.mxu0 0.0
    %1305 = vmatpush2.msra.mxu0 0.0
    %1306 = vmatprep.subr.mxu0 0.0
    %1307 = vmatpush2.msra.mxu0 0.0
    %1308 = vmatprep.subr.mxu0 0.0
    %1309 = vmatpush2.msra.mxu0 0.0
    %1310 = vmatprep.subr.mxu0 0.0
    %1311 = vmatpush2.msra.mxu0 0.0
    %1312 = vmatprep.subr.mxu0 0.0
    %1313 = vmatpush2.msra.mxu0 0.0
    %1314 = vmatprep.subr.mxu0 0.0
    %1315 = vmatpush2.msra.mxu0 0.0
    %1316 = vmatprep.subr.mxu0 0.0
    %1317 = vmatpush2.msra.mxu0 0.0
    %1318 = vmatprep.subr.mxu0 0.0
    %1319 = vmatpush2.msra.mxu0 0.0
    %1320 = vmatprep.subr.mxu0 0.0
    %1321 = vmatpush2.msra.mxu0 0.0
    %1322 = vmatprep.subr.mxu0 0.0
    %1323 = vmatpush2.msra.mxu0 0.0
    %1324 = vmatprep.subr.mxu0 0.0
    %1325 = vmatpush2.msra.mxu0 0.0
    %1326 = vmatprep.subr.mxu0 0.0
    %1327 = vmatpush2.msra.mxu0 0.0
    %1328 = vmatprep.subr.mxu0 0.0
    %1329 = vmatpush2.msra.mxu0 0.0
    %1330 = vmatprep.subr.mxu0 0.0
    %1331 = vmatpush2.msra.mxu0 0.0
    %1332 = vmatprep.subr.mxu0 0.0
    %1333 = vmatpush2.msra.mxu0 0.0
    %1334 = vmatprep.subr.mxu0 0.0
    %1335 = vmatpush2.msra.mxu0 0.0
    %1336 = vmatprep.mubr.f32.mxu0 0.0
    %1337 = vmatmul.mubr.f32.gmra.mxu0 %v1270
    %v1338 = vpop.f32.mrf.mxu0
    %v1339 = vadd.f32 %v1266, %v1338
    %v1340 = vpop.f32.mrf.mxu0
    %1341 = vdwg.mxu0
    %v1342 = vadd.f32 %v31, %v1339
    %v1343 = vld [vmem:[%s4] sm:$0x1]
    %v1345 = vlaneseq
    %v1346 = vshrl.u32 %v1345, 7
    %v1347 = vsub.s32 0, %v1346
    %v1348 = vrot.slane %v1343, %v1347
    %v1350 = vadd.f32 %v1342, %v1348
    %v1351 = vsel %vm76, %v1350, 0.0
    %1352 = vadd.xlane.f32.xlu0 %v1351
    %v1353 = vpop.xlane.xlu0 %1352
    %v1354 = vmul.f32 %v1353, %v830
    %v1355 = vsub.f32 %v1350, %v1354
    %v1356 = vmul.f32 %v1355, %v1355
    %v1357 = vsel %vm76, %v1356, 0.0
    %1358 = vadd.xlane.f32.xlu0 %v1357
    %v1359 = vpop.xlane.xlu0 %1358
    %v1360 = vmul.f32 %v1359, %v830
    %v1361 = vadd.f32 %v1360, 1e-06
    %v1362 = vrsqrt.pop %v1361
    %v1363 = vmul.f32 %v1355, %v1362
    %v1364 = vld [vmem:[%s5] sm:$0x1]
    %v1366 = vlaneseq
    %v1367 = vshrl.u32 %v1366, 7
    %v1368 = vsub.s32 0, %v1367
    %v1369 = vrot.slane %v1364, %v1368
    %v1371 = vmul.f32 %v1363, %v1369
    %v1372 = vld [vmem:[%s6] sm:$0x1]
    %v1374 = vlaneseq
    %v1375 = vshrl.u32 %v1374, 7
    %v1376 = vsub.s32 0, %v1375
    %v1377 = vrot.slane %v1372, %v1376
    %v1379 = vadd.f32 %v1371, %v1377
    %1380 = vst.msk [vmem:[#allocation2 + $0x8] sm:$0xff] %vm76, %v1379
    // Predicated region
    $region30: #{tpu_custom_call.1} parent=1 // pred_check
      _
    $region31: #{tpu_custom_call.1} parent=1 // pred_check_branch
      %1382 = sbr.rel (0) target = $region33
    $region32: #{tpu_custom_call.1} parent=1 // pred_region
      %s1384 = ssub.s32 256, 256
      %1385 = vsyncadd [#allocation3], %s1384
      %s1386 = sshll.u32 [#allocation2], 4
      %s1387 = int_to_ptr.vmem [resolvable:$true] %s1386
      %1392 = dma.vmem_to_hbm [thread:$0]  %s1387, 256, %s7, [#allocation3], 128, 128, 8
    $region33: #{tpu_custom_call.1} parent=1 // pred_fallthru
      _
    // Predicated region
    $region34: #{tpu_custom_call.1} parent=1 // pred_check
      _
    $region35: #{tpu_custom_call.1} parent=1 // pred_check_branch
      %1394 = sbr.rel (0) target = $region37
    $region36: #{tpu_custom_call.1} parent=1 // pred_region
      %s1396 = ssub.s32 512, 512
      %1397 = vsyncadd [#allocation5], %s1396
      %s1398 = sshll.u32 [#allocation4], 4
      %s1399 = int_to_ptr.vmem [resolvable:$true] %s1398
      %1404 = dma.vmem_to_hbm [thread:$0]  %s1399, 512, %s8, [#allocation5], 128, 128, 8
    $region37: #{tpu_custom_call.1} parent=1 // pred_fallthru
      _
    // Predicated region
    $region38: #{tpu_custom_call.1} parent=1 // pred_check
      _
    $region39: #{tpu_custom_call.1} parent=1 // pred_check_branch
      %1406 = sbr.rel (0) target = $region41
    $region40: #{tpu_custom_call.1} parent=1 // pred_region
      %1407 = dma.done [#allocation3], 256
    $region41: #{tpu_custom_call.1} parent=1 // pred_fallthru
      _
    // Predicated region
    $region42: #{tpu_custom_call.1} parent=1 // pred_check
      _
    $region43: #{tpu_custom_call.1} parent=1 // pred_check_branch
      %1409 = sbr.rel (0) target = $region45
    $region44: #{tpu_custom_call.1} parent=1 // pred_region
      %1410 = dma.done [#allocation5], 512
    $region45: #{tpu_custom_call.1} parent=1 // pred_fallthru
      _
    %1411 = vsyncpa [#allocation3], 1
    %1412 = vsyncpa [#allocation5], 1

</llo_original>
